<compile_context>
chip_gen: v5e
topology: v5e:2x2
jax: 0.10.0
libtpu: 0.0.40
codegen_flags: <defaults>
</compile_context>

<pallas_src>
import functools

import jax
import jax.numpy as jnp
from jax.experimental import pallas as pl
from jax.experimental.pallas import tpu as pltpu


def _round_up(x, m):
    return ((x + m - 1) // m) * m


# ----------------------------------------------------------------------------
# Pallas kernel: fused (Cout,K)@(K,TM) matmul + BN shift + activation
# ----------------------------------------------------------------------------
def _conv_mm_kernel(w_ref, p_ref, shift_ref, o_ref, *, activation):
    # w_ref:     (Cout, K)   bf16 conv weight, BN scale pre-folded
    # p_ref:     (K, TM)     bf16 im2col patches (transposed: M on the lane axis)
    # shift_ref: (Cout, 1)   f32 BN shift (zeros for no-BN layers)
    # o_ref:     (Cout, TM)  f32 activations (lane-dense stores)
    acc = jnp.dot(w_ref[...], p_ref[...], preferred_element_type=jnp.float32)
    y = acc + shift_ref[...]
    if activation == "leaky_relu":
        y = jnp.where(y > 0, y, 0.2 * y)
    elif activation == "sigmoid":
        y = jax.nn.sigmoid(y)
    o_ref[...] = y.astype(o_ref.dtype)


# ----------------------------------------------------------------------------
# One Conv2d(+BN)+activation layer; matmul + epilogue run in Pallas
# Input / output activations are channels-major "CNHW": (C, N, H, W)
# ----------------------------------------------------------------------------
def conv_bn_act_pallas(a_cnhw, w, scale, shift, stride, pad, activation):
    C, N, H, W = a_cnhw.shape
    Cout, Cin, kh, kw = w.shape
    assert Cin == C

    a = a_cnhw.astype(jnp.bfloat16)
    # Fused im2col, emitted pre-transposed as (K, N, Ho, Wo).  K ordering is
    # (c, i, j) with c slowest, matching w.reshape(Cout, Cin*kh*kw).
    patches = jax.lax.conv_general_dilated_patches(
        a, (kh, kw), (stride, stride), [(pad, pad), (pad, pad)],
        dimension_numbers=("CNHW", "OIHW", "CNHW"))
    K = Cin * kh * kw
    Ho, Wo = patches.shape[2], patches.shape[3]
    M = N * Ho * Wo
    pT = patches.reshape(K, M)                      # (K, M), bf16

    # Fold BN scale into the weight; matmul inputs are bf16, accum stays f32.
    wT = (w.reshape(Cout, K) * scale[:, None]).astype(jnp.bfloat16)
    shift2 = shift.reshape(Cout, 1).astype(jnp.float32)

    # Lane tiling: TM multiple of 128, <= 1024, and >= 2 grid steps whenever M
    # allows (so the "parallel" grid axis can use both v7x TensorCores).
    Mp = _round_up(M, 128)
    if Mp <= 128:
        TM = Mp
    else:
        TM = min(1024, _round_up(Mp // 2, 128))
        Mp = _round_up(Mp, TM)
    if Mp != M:
        pT = jnp.pad(pT, ((0, 0), (0, Mp - M)))

    kernel = functools.partial(_conv_mm_kernel, activation=activation)
    out = pl.pallas_call(
        kernel,
        out_shape=jax.ShapeDtypeStruct((Cout, Mp), jnp.float32),
        grid_spec=pltpu.PrefetchScalarGridSpec(
            num_scalar_prefetch=0,
            grid=(Mp // TM,),
            in_specs=[
                pl.BlockSpec((Cout, K), lambda i: (0, 0)),
                pl.BlockSpec((K, TM), lambda i: (0, i)),
                pl.BlockSpec((Cout, 1), lambda i: (0, 0)),
            ],
            out_specs=pl.BlockSpec((Cout, TM), lambda i: (0, i)),
        ),
        compiler_params=pltpu.CompilerParams(
            dimension_semantics=("parallel",)),
    )(wT, pT, shift2)

    return out[:, :M].reshape(Cout, N, Ho, Wo)      # stays in "CNHW" layout


# ----------------------------------------------------------------------------
# Parameter init (deterministic, in-script).  DCGAN uses N(0, 0.02); we use a
# slightly larger std so the 5-layer smoke test keeps a non-degenerate signal.
# ----------------------------------------------------------------------------
def init_params(key, channels=3, ndf=8):
    ks = jax.random.split(key, 16)

    def conv_w(k, cout, cin):
        return 0.1 * jax.random.normal(k, (cout, cin, 4, 4), jnp.float32)

    def bn(k, c):
        k1, k2, k3, k4 = jax.random.split(k, 4)
        gamma = 1.0 + 0.1 * jax.random.normal(k1, (c,), jnp.float32)
        beta = 0.1 * jax.random.normal(k2, (c,), jnp.float32)
        rm = 0.1 * jax.random.normal(k3, (c,), jnp.float32)
        rv = 0.5 + jax.random.uniform(k4, (c,), jnp.float32)
        return (gamma, beta, rm, rv)

    return {
        "w1": conv_w(ks[0], ndf, channels),
        "w2": conv_w(ks[1], ndf * 2, ndf),
        "bn2": bn(ks[2], ndf * 2),
        "w3": conv_w(ks[3], ndf * 4, ndf * 2),
        "bn3": bn(ks[4], ndf * 4),
        "w4": conv_w(ks[5], ndf * 8, ndf * 4),
        "bn4": bn(ks[6], ndf * 8),
        "w5": conv_w(ks[7], 1, ndf * 8),
    }


# ----------------------------------------------------------------------------
# Full forward pass (eval mode).  Layers 1-3 use the Pallas kernel; layers 4-5
# are tiny (M = 16*N and M = N) and run as plain XLA ops per the perf review.
# ----------------------------------------------------------------------------
def discriminator_forward(params, x):
    eps = 1e-5
    # NCHW -> channels-major "CNHW" once; stays in that layout between layers.
    h = jnp.transpose(x, (1, 0, 2, 3))

    # layer 1: Conv(4,2,1) + LeakyReLU(0.2)  (no BN); Dropout = identity (eval)
    c1 = params["w1"].shape[0]
    h = conv_bn_act_pallas(h, params["w1"], jnp.ones((c1,), jnp.float32),
                           jnp.zeros((c1,), jnp.float32),
                           stride=2, pad=1, activation="leaky_relu")
    # layers 2-3: Conv(4,2,1) + BN + LeakyReLU(0.2); Dropout = identity (eval)
    for idx in (2, 3):
        gamma, beta, rm, rv = params[f"bn{idx}"]
        scale = gamma / jnp.sqrt(rv + eps)
        shift = beta - rm * scale
        h = conv_bn_act_pallas(h, params[f"w{idx}"], scale, shift,
                               stride=2, pad=1, activation="leaky_relu")

    # layers 4-5: too small to amortise a pallas_call; plain XLA ops.
    h = jnp.transpose(h, (1, 0, 2, 3)).astype(jnp.float32)   # back to NCHW
    gamma, beta, rm, rv = params["bn4"]
    scale = gamma / jnp.sqrt(rv + eps)
    shift = beta - rm * scale
    h = jax.lax.conv_general_dilated(
        h, params["w4"], (2, 2), [(1, 1), (1, 1)],
        dimension_numbers=("NCHW", "OIHW", "NCHW"))
    h = h * scale[None, :, None, None] + shift[None, :, None, None]
    h = jnp.where(h > 0, h, 0.2 * h)
    h = jax.lax.conv_general_dilated(
        h, params["w5"], (1, 1), [(0, 0), (0, 0)],
        dimension_numbers=("NCHW", "OIHW", "NCHW"))
    return jax.nn.sigmoid(h)                                  # (N, 1, 1, 1)


# ----------------------------------------------------------------------------
# Pure-JAX f32 reference (for correctness check)
# ----------------------------------------------------------------------------
def ref_forward(params, x):
    eps = 1e-5

    def conv(x, w, stride, pad):
        return jax.lax.conv_general_dilated(
            x, w, (stride, stride), [(pad, pad), (pad, pad)],
            dimension_numbers=("NCHW", "OIHW", "NCHW"))

    def leaky(v):
        return jnp.where(v > 0, v, 0.2 * v)

    h = leaky(conv(x, params["w1"], 2, 1))
    for idx in (2, 3, 4):
        gamma, beta, rm, rv = params[f"bn{idx}"]
        h = conv(h, params[f"w{idx}"], 2, 1)
        h = ((h - rm[None, :, None, None]) /
             jnp.sqrt(rv[None, :, None, None] + eps) *
             gamma[None, :, None, None] + beta[None, :, None, None])
        h = leaky(h)
    h = conv(h, params["w5"], 1, 0)
    return jax.nn.sigmoid(h)


if __name__ == "__main__":
    key = jax.random.PRNGKey(0)
    kp, kx = jax.random.split(key)

    # Small-but-valid DCGAN discriminator config: 64x64 input (required so the
    # final 4x4/s1/p0 conv sees a 4x4 map), 3 channels, ndf=8, batch=2.
    params = init_params(kp, channels=3, ndf=8)
    x = jax.random.normal(kx, (2, 3, 64, 64), jnp.float32)

    fwd = jax.jit(discriminator_forward)
    out = jax.block_until_ready(fwd(params, x))
    assert out.shape == (2, 1, 1, 1), out.shape

    ref = jax.block_until_ready(ref_forward(params, x))
    # bf16 matmul inputs (f32 accumulation) vs the f32 reference.
    assert jnp.allclose(out, ref, atol=2e-2, rtol=2e-2), (out, ref)

    print("KERNEL_OK")
</pallas_src>

<mosaic_0001>
module attributes {stable_mosaic.version = 11 : i64} {
  func.func @_conv_mm_kernel(%arg0: i32, %arg1: memref<8x48xbf16, #tpu.memory_space<vmem>>, %arg2: memref<48x1024xbf16, #tpu.memory_space<vmem>>, %arg3: memref<8x1xf32, #tpu.memory_space<vmem>>, %arg4: memref<8x1024xf32, #tpu.memory_space<vmem>>) attributes {dimension_semantics = [#tpu.dimension_semantics<parallel>], iteration_bounds = array<i64: 2>, scalar_prefetch = 0 : i64, scratch_operands = 0 : i64, tpu.core_type = #tpu.core_type<tc>, window_params = [{pipeline_mode = #tpu.pipeline_mode<synchronous>, transform_indices = @transform_0, window_bounds = array<i64: 8, 48>}, {transform_indices = @transform_1, window_bounds = array<i64: 48, 1024>}, {pipeline_mode = #tpu.pipeline_mode<synchronous>, transform_indices = @transform_2, window_bounds = array<i64: 8, 1>}, {transform_indices = @transform_3, window_bounds = array<i64: 8, 1024>}]} {
    %c0 = arith.constant 0 : index
    %c0_0 = arith.constant 0 : index
    %0 = vector.load %arg1[%c0, %c0_0] : memref<8x48xbf16, #tpu.memory_space<vmem>>, vector<8x48xbf16>
    %c0_1 = arith.constant 0 : index
    %c0_2 = arith.constant 0 : index
    %1 = vector.load %arg2[%c0_1, %c0_2] : memref<48x1024xbf16, #tpu.memory_space<vmem>>, vector<48x1024xbf16>
    %cst = arith.constant dense<0.000000e+00> : vector<8x1024xf32>
    %2 = tpu.matmul %0, %1, %cst {dimension_numbers = #tpu.dot_dimension_numbers<[1], [0], [0], [1], [0, 0, 1, 1], [], []>} : vector<8x48xbf16>, vector<48x1024xbf16>, vector<8x1024xf32> -> vector<8x1024xf32>
    %c0_3 = arith.constant 0 : index
    %c0_4 = arith.constant 0 : index
    %3 = vector.load %arg3[%c0_3, %c0_4] : memref<8x1xf32, #tpu.memory_space<vmem>>, vector<8x1xf32>
    %4 = vector.broadcast %3 : vector<8x1xf32> to vector<8x1024xf32>
    %5 = arith.addf %2, %4 : vector<8x1024xf32>
    %cst_5 = arith.constant 0.000000e+00 : f32
    %6 = vector.broadcast %cst_5 : f32 to vector<8x1024xf32>
    %7 = arith.cmpf ogt, %5, %6 : vector<8x1024xf32>
    %cst_6 = arith.constant 2.000000e-01 : f32
    %8 = vector.broadcast %cst_6 : f32 to vector<8x1024xf32>
    %9 = arith.mulf %8, %5 : vector<8x1024xf32>
    %10 = arith.select %7, %5, %9 : vector<8x1024xi1>, vector<8x1024xf32>
    %c0_7 = arith.constant 0 : index
    %c0_8 = arith.constant 0 : index
    %11 = vector.load %arg4[%c0_7, %c0_8] : memref<8x1024xf32, #tpu.memory_space<vmem>>, vector<8x1024xf32>
    tpu.vector_store %arg4[%c0_7, %c0_8], %10 {strides = array<i32>} : memref<8x1024xf32, #tpu.memory_space<vmem>>, vector<8x1024xf32>,
    return
  }
  func.func @transform_0(%arg0: i32) -> (i32, i32) {
    %c0_i32 = arith.constant 0 : i32
    %c0_i32_0 = arith.constant 0 : i32
    %c0_i32_1 = arith.constant 0 : i32
    return %c0_i32, %c0_i32_0 : i32, i32
  }
  func.func @transform_1(%arg0: i32) -> (i32, i32) {
    %c0_i32 = arith.constant 0 : i32
    %c0_i32_0 = arith.constant 0 : i32
    return %c0_i32, %arg0 : i32, i32
  }
  func.func @transform_2(%arg0: i32) -> (i32, i32) {
    %c0_i32 = arith.constant 0 : i32
    %c0_i32_0 = arith.constant 0 : i32
    %c0_i32_1 = arith.constant 0 : i32
    return %c0_i32, %c0_i32_0 : i32, i32
  }
  func.func @transform_3(%arg0: i32) -> (i32, i32) {
    %c0_i32 = arith.constant 0 : i32
    %c0_i32_0 = arith.constant 0 : i32
    return %c0_i32, %arg0 : i32, i32
  }
}

module attributes {stable_mosaic.version = 11 : i64} {
  func.func @_conv_mm_kernel(%arg0: i32, %arg1: memref<16x128xbf16, #tpu.memory_space<vmem>>, %arg2: memref<128x256xbf16, #tpu.memory_space<vmem>>, %arg3: memref<16x1xf32, #tpu.memory_space<vmem>>, %arg4: memref<16x256xf32, #tpu.memory_space<vmem>>) attributes {dimension_semantics = [#tpu.dimension_semantics<parallel>], iteration_bounds = array<i64: 2>, scalar_prefetch = 0 : i64, scratch_operands = 0 : i64, tpu.core_type = #tpu.core_type<tc>, window_params = [{pipeline_mode = #tpu.pipeline_mode<synchronous>, transform_indices = @transform_0, window_bounds = array<i64: 16, 128>}, {transform_indices = @transform_1, window_bounds = array<i64: 128, 256>}, {pipeline_mode = #tpu.pipeline_mode<synchronous>, transform_indices = @transform_2, window_bounds = array<i64: 16, 1>}, {transform_indices = @transform_3, window_bounds = array<i64: 16, 256>}]} {
    %c0 = arith.constant 0 : index
    %c0_0 = arith.constant 0 : index
    %0 = vector.load %arg1[%c0, %c0_0] : memref<16x128xbf16, #tpu.memory_space<vmem>>, vector<16x128xbf16>
    %c0_1 = arith.constant 0 : index
    %c0_2 = arith.constant 0 : index
    %1 = vector.load %arg2[%c0_1, %c0_2] : memref<128x256xbf16, #tpu.memory_space<vmem>>, vector<128x256xbf16>
    %cst = arith.constant dense<0.000000e+00> : vector<16x256xf32>
    %2 = tpu.matmul %0, %1, %cst {dimension_numbers = #tpu.dot_dimension_numbers<[1], [0], [0], [1], [0, 0, 1, 1], [], []>} : vector<16x128xbf16>, vector<128x256xbf16>, vector<16x256xf32> -> vector<16x256xf32>
    %c0_3 = arith.constant 0 : index
    %c0_4 = arith.constant 0 : index
    %3 = vector.load %arg3[%c0_3, %c0_4] : memref<16x1xf32, #tpu.memory_space<vmem>>, vector<16x1xf32>
    %4 = vector.broadcast %3 : vector<16x1xf32> to vector<16x256xf32>
    %5 = arith.addf %2, %4 : vector<16x256xf32>
    %cst_5 = arith.constant 0.000000e+00 : f32
    %6 = vector.broadcast %cst_5 : f32 to vector<16x256xf32>
    %7 = arith.cmpf ogt, %5, %6 : vector<16x256xf32>
    %cst_6 = arith.constant 2.000000e-01 : f32
    %8 = vector.broadcast %cst_6 : f32 to vector<16x256xf32>
    %9 = arith.mulf %8, %5 : vector<16x256xf32>
    %10 = arith.select %7, %5, %9 : vector<16x256xi1>, vector<16x256xf32>
    %c0_7 = arith.constant 0 : index
    %c0_8 = arith.constant 0 : index
    %11 = vector.load %arg4[%c0_7, %c0_8] : memref<16x256xf32, #tpu.memory_space<vmem>>, vector<16x256xf32>
    tpu.vector_store %arg4[%c0_7, %c0_8], %10 {strides = array<i32>} : memref<16x256xf32, #tpu.memory_space<vmem>>, vector<16x256xf32>,
    return
  }
  func.func @transform_0(%arg0: i32) -> (i32, i32) {
    %c0_i32 = arith.constant 0 : i32
    %c0_i32_0 = arith.constant 0 : i32
    %c0_i32_1 = arith.constant 0 : i32
    return %c0_i32, %c0_i32_0 : i32, i32
  }
  func.func @transform_1(%arg0: i32) -> (i32, i32) {
    %c0_i32 = arith.constant 0 : i32
    %c0_i32_0 = arith.constant 0 : i32
    return %c0_i32, %arg0 : i32, i32
  }
  func.func @transform_2(%arg0: i32) -> (i32, i32) {
    %c0_i32 = arith.constant 0 : i32
    %c0_i32_0 = arith.constant 0 : i32
    %c0_i32_1 = arith.constant 0 : i32
    return %c0_i32, %c0_i32_0 : i32, i32
  }
  func.func @transform_3(%arg0: i32) -> (i32, i32) {
    %c0_i32 = arith.constant 0 : i32
    %c0_i32_0 = arith.constant 0 : i32
    return %c0_i32, %arg0 : i32, i32
  }
}

module attributes {stable_mosaic.version = 11 : i64} {
  func.func @_conv_mm_kernel(%arg0: i32, %arg1: memref<32x256xbf16, #tpu.memory_space<vmem>>, %arg2: memref<256x128xbf16, #tpu.memory_space<vmem>>, %arg3: memref<32x1xf32, #tpu.memory_space<vmem>>, %arg4: memref<32x128xf32, #tpu.memory_space<vmem>>) attributes {dimension_semantics = [#tpu.dimension_semantics<parallel>], iteration_bounds = array<i64: 1>, scalar_prefetch = 0 : i64, scratch_operands = 0 : i64, tpu.core_type = #tpu.core_type<tc>, window_params = [{pipeline_mode = #tpu.pipeline_mode<synchronous>, transform_indices = @transform_0, window_bounds = array<i64: 32, 256>}, {transform_indices = @transform_1, window_bounds = array<i64: 256, 128>}, {pipeline_mode = #tpu.pipeline_mode<synchronous>, transform_indices = @transform_2, window_bounds = array<i64: 32, 1>}, {transform_indices = @transform_3, window_bounds = array<i64: 32, 128>}]} {
    %c0 = arith.constant 0 : index
    %c0_0 = arith.constant 0 : index
    %0 = vector.load %arg1[%c0, %c0_0] : memref<32x256xbf16, #tpu.memory_space<vmem>>, vector<32x256xbf16>
    %c0_1 = arith.constant 0 : index
    %c0_2 = arith.constant 0 : index
    %1 = vector.load %arg2[%c0_1, %c0_2] : memref<256x128xbf16, #tpu.memory_space<vmem>>, vector<256x128xbf16>
    %cst = arith.constant dense<0.000000e+00> : vector<32x128xf32>
    %2 = tpu.matmul %0, %1, %cst {dimension_numbers = #tpu.dot_dimension_numbers<[1], [0], [0], [1], [0, 0, 1, 1], [], []>} : vector<32x256xbf16>, vector<256x128xbf16>, vector<32x128xf32> -> vector<32x128xf32>
    %c0_3 = arith.constant 0 : index
    %c0_4 = arith.constant 0 : index
    %3 = vector.load %arg3[%c0_3, %c0_4] : memref<32x1xf32, #tpu.memory_space<vmem>>, vector<32x1xf32>
    %4 = vector.broadcast %3 : vector<32x1xf32> to vector<32x128xf32>
    %5 = arith.addf %2, %4 : vector<32x128xf32>
    %cst_5 = arith.constant 0.000000e+00 : f32
    %6 = vector.broadcast %cst_5 : f32 to vector<32x128xf32>
    %7 = arith.cmpf ogt, %5, %6 : vector<32x128xf32>
    %cst_6 = arith.constant 2.000000e-01 : f32
    %8 = vector.broadcast %cst_6 : f32 to vector<32x128xf32>
    %9 = arith.mulf %8, %5 : vector<32x128xf32>
    %10 = arith.select %7, %5, %9 : vector<32x128xi1>, vector<32x128xf32>
    %c0_7 = arith.constant 0 : index
    %c0_8 = arith.constant 0 : index
    %11 = vector.load %arg4[%c0_7, %c0_8] : memref<32x128xf32, #tpu.memory_space<vmem>>, vector<32x128xf32>
    tpu.vector_store %arg4[%c0_7, %c0_8], %10 {strides = array<i32>} : memref<32x128xf32, #tpu.memory_space<vmem>>, vector<32x128xf32>,
    return
  }
  func.func @transform_0(%arg0: i32) -> (i32, i32) {
    %c0_i32 = arith.constant 0 : i32
    %c0_i32_0 = arith.constant 0 : i32
    %c0_i32_1 = arith.constant 0 : i32
    return %c0_i32, %c0_i32_0 : i32, i32
  }
  func.func @transform_1(%arg0: i32) -> (i32, i32) {
    %c0_i32 = arith.constant 0 : i32
    %c0_i32_0 = arith.constant 0 : i32
    return %c0_i32, %arg0 : i32, i32
  }
  func.func @transform_2(%arg0: i32) -> (i32, i32) {
    %c0_i32 = arith.constant 0 : i32
    %c0_i32_0 = arith.constant 0 : i32
    %c0_i32_1 = arith.constant 0 : i32
    return %c0_i32, %c0_i32_0 : i32, i32
  }
  func.func @transform_3(%arg0: i32) -> (i32, i32) {
    %c0_i32 = arith.constant 0 : i32
    %c0_i32_0 = arith.constant 0 : i32
    return %c0_i32, %arg0 : i32, i32
  }
}

</mosaic_0001>

<llo_original>
// kernel: discriminator_forward.3
$region0: #{discriminator_forward.3}
  #allocation0 [shape = 'u32[]', space=smem, size = 0x4, offset = 0x4, fixed_abs, tag = 'smem constant byte address 0x4 - core index']
  #allocation1 [shape = 'u32[72,128]{1,0:T(1,128)}', space=vmem, size = 0x9000, scoped, tag = 'internal scratch']
  %s0 = inlined_call_operand.vmem [shape: bf16[8,48], index: 0, kind: input, shape index: {}]
  %s1 = inlined_call_operand.vmem [shape: bf16[48,2048], index: 1, kind: input, shape index: {}]
  %s2 = inlined_call_operand.vmem [shape: f32[8,1], index: 2, kind: input, shape index: {}]
  %s3 = inlined_call_operand.vmem [shape: f32[8,2048], index: 3, kind: output, shape index: {}]
  %s4 = sld [smem:[#allocation0]]
  $region68: #{discriminator_forward.3} parent=0
    _
  %s6 = ssub.s32 1, %s4
  %s7 = scalar_select 0, %s6, %s4
  $region1: #{discriminator_forward.3} parent=0
    #allocation2 [shape = 'u8[196608]{0}', space=vmem, size = 0x30000, scoped, tag = 'input window, operand 1']
    loop: start=0, step=1, limit=4
    $region2: #{discriminator_forward.3} parent=1 // loop_pre_header
      _
    $region3: #{discriminator_forward.3} parent=1 // loop_header
      %s9 = sphi 0, %s13
      %p10 = scmp.ge.s32.totalorder %s9, 4
      %s17 = sphi 0, %s17
      %s19 = sphi 0, %s17
      %s20 = sphi 0, %s19
      %s34 = sphi 0, %s20
      %s40 = sphi 0, %s42
      %s43 = sphi 0, %s40
      %s44 = sphi 0, %s43
      %s60 = sphi 0, %s44
      %s64 = sphi 0, %s64
      %s66 = sphi 0, %s64
      %s67 = sphi 0, %s66
      %s81 = sphi 0, %s67
      %s87 = sphi 0, %s89
      %s90 = sphi 0, %s87
      %s91 = sphi 0, %s90
      %s107 = sphi 0, %s91
    $region4: #{discriminator_forward.3} parent=1 // loop_header_branch
      %12 = sbr.rel (%p10) target = $region8
    $region5: #{discriminator_forward.3} parent=1 // loop_body
      %s14 = ssub.s32 %s9, 1
      %s15 = ssub.s32 %s9, 2
      %s16 = sadd.s32 %s9, 1
      %s18 = sadd.s32 %s17, 1
      %p21 = scmp.eq.s32.totalorder %s9, 1
      %p22 = scmp.ne.s32.totalorder %s17, %s19
      %p23 = scmp.eq.s32.totalorder %s9, 0
      %p24 = por %p22, %p23
      %p25 = scmp.ne.s32.totalorder %s17, %s19
      %p26 = scmp.eq.s32.totalorder %s14, 1
      %p27 = por %p25, %p26
      %p28 = scmp.ne.s32.totalorder %s19, %s20
      %p29 = scmp.eq.s32.totalorder %s14, 0
      %p30 = por %p28, %p29
      %p31 = scmp.ne.s32.totalorder %s19, %s20
      %p32 = scmp.eq.s32.totalorder %s15, 1
      %p33 = por %p31, %p32
      %p35 = scmp.ne.s32.totalorder %s20, %s34
      %p36 = scmp.eq.s32.totalorder %s15, 0
      %p37 = por %p35, %p36
      %s38 = ssub.s32 %s9, %s16
      %p39 = scmp.eq.s32.totalorder %s38, 0
      %s41 = sadd.s32 %s40, 1
      %s42 = scalar_select %p39, %s40, %s41
      %p45 = pneg %p39
      %p46 = scmp.eq.s32.totalorder %s9, 1
      %p47 = por %p45, %p46
      %p48 = scmp.ne.s32.totalorder %s40, %s43
      %p49 = scmp.eq.s32.totalorder %s9, 0
      %p50 = por %p48, %p49
      %p51 = scmp.ne.s32.totalorder %s40, %s43
      %p52 = scmp.eq.s32.totalorder %s14, 1
      %p53 = por %p51, %p52
      %p54 = scmp.ne.s32.totalorder %s43, %s44
      %p55 = scmp.eq.s32.totalorder %s14, 0
      %p56 = por %p54, %p55
      %p57 = scmp.ne.s32.totalorder %s43, %s44
      %p58 = scmp.eq.s32.totalorder %s15, 1
      %p59 = por %p57, %p58
      %p61 = scmp.ne.s32.totalorder %s44, %s60
      %p62 = scmp.eq.s32.totalorder %s15, 0
      %p63 = por %p61, %p62
      %s65 = sadd.s32 %s64, 1
      %p68 = scmp.eq.s32.totalorder %s9, 1
      %p69 = scmp.ne.s32.totalorder %s64, %s66
      %p70 = scmp.eq.s32.totalorder %s9, 0
      %p71 = por %p69, %p70
      %p72 = scmp.ne.s32.totalorder %s64, %s66
      %p73 = scmp.eq.s32.totalorder %s14, 1
      %p74 = por %p72, %p73
      %p75 = scmp.ne.s32.totalorder %s66, %s67
      %p76 = scmp.eq.s32.totalorder %s14, 0
      %p77 = por %p75, %p76
      %p78 = scmp.ne.s32.totalorder %s66, %s67
      %p79 = scmp.eq.s32.totalorder %s15, 1
      %p80 = por %p78, %p79
      %p82 = scmp.ne.s32.totalorder %s67, %s81
      %p83 = scmp.eq.s32.totalorder %s15, 0
      %p84 = por %p82, %p83
      %s85 = ssub.s32 %s9, %s16
      %p86 = scmp.eq.s32.totalorder %s85, 0
      %s88 = sadd.s32 %s87, 1
      %s89 = scalar_select %p86, %s87, %s88
      %p92 = pneg %p86
      %p93 = scmp.eq.s32.totalorder %s9, 1
      %p94 = por %p92, %p93
      %p95 = scmp.ne.s32.totalorder %s87, %s90
      %p96 = scmp.eq.s32.totalorder %s9, 0
      %p97 = por %p95, %p96
      %p98 = scmp.ne.s32.totalorder %s87, %s90
      %p99 = scmp.eq.s32.totalorder %s14, 1
      %p100 = por %p98, %p99
      %p101 = scmp.ne.s32.totalorder %s90, %s91
      %p102 = scmp.eq.s32.totalorder %s14, 0
      %p103 = por %p101, %p102
      %p104 = scmp.ne.s32.totalorder %s90, %s91
      %p105 = scmp.eq.s32.totalorder %s15, 1
      %p106 = por %p104, %p105
      %p108 = scmp.ne.s32.totalorder %s91, %s107
      %p109 = scmp.eq.s32.totalorder %s15, 0
      %p110 = por %p108, %p109
      %p111 = scmp.le.s32.totalorder 1, %s9
      %p112 = scmp.lt.s32.totalorder %s9, 3
      %p113 = pnand %p111, %p112
      %p114 = pneg %p113
      // Predicated region
      $region9: #{discriminator_forward.3} parent=5 // pred_check
        _
      $region10: #{discriminator_forward.3} parent=5 // pred_check_branch
        %116 = sbr.rel (%p113) target = $region12
      $region11: #{discriminator_forward.3} parent=5 // pred_region
        %s117 = ssub.s32 %s9, 1
        // Predicated region
        $region13: #{discriminator_forward.3} parent=11 // pred_check
          %p118 = pneg %p30
        $region14: #{discriminator_forward.3} parent=11 // pred_check_branch
          %120 = sbr.rel (%p118) target = $region16
        $region15: #{discriminator_forward.3} parent=11 // pred_region
          _
        $region16: #{discriminator_forward.3} parent=11 // pred_fallthru
          _
        // Predicated region
        $region17: #{discriminator_forward.3} parent=11 // pred_check
          %p121 = pneg %p77
        $region18: #{discriminator_forward.3} parent=11 // pred_check_branch
          %123 = sbr.rel (%p121) target = $region20
        $region19: #{discriminator_forward.3} parent=11 // pred_region
          _
        $region20: #{discriminator_forward.3} parent=11 // pred_fallthru
          _
      $region12: #{discriminator_forward.3} parent=5 // pred_fallthru
        _
      %p124 = scmp.lt.s32.totalorder %s9, 2
      // Predicated region
      $region21: #{discriminator_forward.3} parent=5 // pred_check
        %p125 = pneg %p124
      $region22: #{discriminator_forward.3} parent=5 // pred_check_branch
        %127 = sbr.rel (%p125) target = $region24
      $region23: #{discriminator_forward.3} parent=5 // pred_region
        // Predicated region
        $region25: #{discriminator_forward.3} parent=23 // pred_check
          %p128 = pneg %p50
        $region26: #{discriminator_forward.3} parent=23 // pred_check_branch
          %130 = sbr.rel (%p128) target = $region28
        $region27: #{discriminator_forward.3} parent=23 // pred_region
          %s131 = sand.u32 %s40, 1
          %s132 = sand.u32 %s40, 1
          %s133 = smul.addr %s132, 192
          %s134 = scalar_lea.vmem [#allocation2], %s133
          %s135 = smul.u32 8, %s9
          %s136 = smul.addr %s135, 4
          %s137 = scalar_lea.vmem %s1, %s136
          // Predicated region
          $region29: #{discriminator_forward.3} parent=27 // pred_check
            _
          $region30: #{discriminator_forward.3} parent=27 // pred_check_branch
            %139 = sbr.rel (0) target = $region32
          $region31: #{discriminator_forward.3} parent=27 // pred_region
            // Predicated region
            $region33: #{discriminator_forward.3} parent=31 // pred_check
              _
            $region34: #{discriminator_forward.3} parent=31 // pred_check_branch
              %141 = sbr.rel (0) target = $region36
            $region35: #{discriminator_forward.3} parent=31 // pred_region
              loop: start=0, step=1, limit=1
              $region37: #{discriminator_forward.3} parent=35 // loop_pre_header
                _
              $region38: #{discriminator_forward.3} parent=35 // loop_header
                %s143 = sphi 0, %s147
                %p144 = scmp.ge.s32.totalorder %s143, 1
                %s148 = sphi %s137, %s137
                %s149 = sphi %s134, %s134
              $region39: #{discriminator_forward.3} parent=35 // loop_header_branch
                %146 = sbr.rel (%p144) target = $region43
              $region40: #{discriminator_forward.3} parent=35 // loop_body
                %v150 = vld [vmem:[%s148] sm:$0xff]
                %151 = vst [vmem:[%s149] sm:$0xff] %v150
                %v152 = vld [vmem:[%s148 + $0x8] sm:$0xff]
                %153 = vst [vmem:[%s149 + $0x8] sm:$0xff] %v152
                %v154 = vld [vmem:[%s148 + $0x10] sm:$0xff]
                %155 = vst [vmem:[%s149 + $0x10] sm:$0xff] %v154
                %v156 = vld [vmem:[%s148 + $0x18] sm:$0xff]
                %157 = vst [vmem:[%s149 + $0x18] sm:$0xff] %v156
                %v158 = vld [vmem:[%s148 + $0x40] sm:$0xff]
                %159 = vst [vmem:[%s149 + $0x20] sm:$0xff] %v158
                %v160 = vld [vmem:[%s148 + $0x48] sm:$0xff]
                %161 = vst [vmem:[%s149 + $0x28] sm:$0xff] %v160
                %v162 = vld [vmem:[%s148 + $0x50] sm:$0xff]
                %163 = vst [vmem:[%s149 + $0x30] sm:$0xff] %v162
                %v164 = vld [vmem:[%s148 + $0x58] sm:$0xff]
                %165 = vst [vmem:[%s149 + $0x38] sm:$0xff] %v164
                %v166 = vld [vmem:[%s148 + $0x80] sm:$0xff]
                %167 = vst [vmem:[%s149 + $0x40] sm:$0xff] %v166
                %v168 = vld [vmem:[%s148 + $0x88] sm:$0xff]
                %169 = vst [vmem:[%s149 + $0x48] sm:$0xff] %v168
                %v170 = vld [vmem:[%s148 + $0x90] sm:$0xff]
                %171 = vst [vmem:[%s149 + $0x50] sm:$0xff] %v170
                %v172 = vld [vmem:[%s148 + $0x98] sm:$0xff]
                %173 = vst [vmem:[%s149 + $0x58] sm:$0xff] %v172
                %v174 = vld [vmem:[%s148 + $0xc0] sm:$0xff]
                %175 = vst [vmem:[%s149 + $0x60] sm:$0xff] %v174
                %v176 = vld [vmem:[%s148 + $0xc8] sm:$0xff]
                %177 = vst [vmem:[%s149 + $0x68] sm:$0xff] %v176
                %v178 = vld [vmem:[%s148 + $0xd0] sm:$0xff]
                %179 = vst [vmem:[%s149 + $0x70] sm:$0xff] %v178
                %v180 = vld [vmem:[%s148 + $0xd8] sm:$0xff]
                %181 = vst [vmem:[%s149 + $0x78] sm:$0xff] %v180
                %v182 = vld [vmem:[%s148 + $0x100] sm:$0xff]
                %183 = vst [vmem:[%s149 + $0x80] sm:$0xff] %v182
                %v184 = vld [vmem:[%s148 + $0x108] sm:$0xff]
                %185 = vst [vmem:[%s149 + $0x88] sm:$0xff] %v184
                %v186 = vld [vmem:[%s148 + $0x110] sm:$0xff]
                %187 = vst [vmem:[%s149 + $0x90] sm:$0xff] %v186
                %v188 = vld [vmem:[%s148 + $0x118] sm:$0xff]
                %189 = vst [vmem:[%s149 + $0x98] sm:$0xff] %v188
                %v190 = vld [vmem:[%s148 + $0x140] sm:$0xff]
                %191 = vst [vmem:[%s149 + $0xa0] sm:$0xff] %v190
                %v192 = vld [vmem:[%s148 + $0x148] sm:$0xff]
                %193 = vst [vmem:[%s149 + $0xa8] sm:$0xff] %v192
                %v194 = vld [vmem:[%s148 + $0x150] sm:$0xff]
                %195 = vst [vmem:[%s149 + $0xb0] sm:$0xff] %v194
                %v196 = vld [vmem:[%s148 + $0x158] sm:$0xff]
                %197 = vst [vmem:[%s149 + $0xb8] sm:$0xff] %v196
              $region41: #{discriminator_forward.3} parent=35 // loop_footer
                %s147 = sadd.s32 1, %s143
              $region42: #{discriminator_forward.3} parent=35 // loop_footer_branch
                %142 = sbr.rel target = $region38
              $region43: #{discriminator_forward.3} parent=35 // loop_exit
                _
            $region36: #{discriminator_forward.3} parent=31 // pred_fallthru
              _
            // Predicated region
            $region44: #{discriminator_forward.3} parent=31 // pred_check
              _
            $region45: #{discriminator_forward.3} parent=31 // pred_check_branch
              %199 = sbr.rel target = $region47
            $region46: #{discriminator_forward.3} parent=31 // pred_region
              _
            $region47: #{discriminator_forward.3} parent=31 // pred_fallthru
              _
          $region32: #{discriminator_forward.3} parent=27 // pred_fallthru
            _
          %200 = vnop
        $region28: #{discriminator_forward.3} parent=23 // pred_fallthru
          _
      $region24: #{discriminator_forward.3} parent=5 // pred_fallthru
        _
      %p201 = scmp.le.s32.totalorder 1, %s9
      %p202 = scmp.lt.s32.totalorder %s9, 3
      %p203 = pnand %p201, %p202
      %p204 = pneg %p203
      // Predicated region
      $region48: #{discriminator_forward.3} parent=5 // pred_check
        _
      $region49: #{discriminator_forward.3} parent=5 // pred_check_branch
        %206 = sbr.rel (%p203) target = $region51
      $region50: #{discriminator_forward.3} parent=5 // pred_region
        %s207 = ssub.s32 %s9, 1
        %s208 = sand.u32 %s43, 1
        %s209 = sand.u32 %s43, 1
        %s210 = smul.addr %s209, 192
        %s211 = scalar_lea.vmem [#allocation2], %s210
        // Predicated region
        $region52: #{discriminator_forward.3} parent=50 // pred_check
          %p212 = pneg %p56
        $region53: #{discriminator_forward.3} parent=50 // pred_check_branch
          %214 = sbr.rel (%p212) target = $region55
        $region54: #{discriminator_forward.3} parent=50 // pred_region
          _
        $region55: #{discriminator_forward.3} parent=50 // pred_fallthru
          _
        %p215 = pneg %p30
        %p216 = pneg %p27
        %s217 = sand.u32 %s43, 1
        %s218 = sand.u32 %s43, 1
        %s219 = smul.addr %s218, 192
        %s220 = scalar_lea.vmem [#allocation2], %s219
        %p221 = pneg %p56
        %p222 = pneg %p53
        %p223 = pneg %p77
        %p224 = pneg %p74
        %p225 = pneg %p103
        %p226 = pneg %p100
        %s227 = smul.u32 8, %s14
        %p228 = scmp.lt.s32.totalorder %s227, 15
        %s229 = scalar_select %p228, %s227, 15
        %s230 = smul.addr %s229, 8
        %s231 = scalar_lea.vmem %s3, %s230
        %s232 = smul.u32 8, %s14
        %s233 = smul.u32 8, %s14
        %p234 = scmp.lt.s32.totalorder %s233, 15
        %s235 = scalar_select %p234, %s233, 15
        %s236 = smul.addr %s235, 8
        %s237 = scalar_lea.vmem %s3, %s236
        %s238 = smul.u32 8, %s14
        %v240 = vld [vmem:[%s0] sm:$0xf]
        %v241 = vld [vmem:[%s211] sm:$0xff]
        %v242 = vld [vmem:[%s211 + $0x8] sm:$0xff]
        %v243 = vld [vmem:[%s211 + $0x10] sm:$0xff]
        %v244 = vld [vmem:[%s211 + $0x18] sm:$0xff]
        %v245 = vld [vmem:[%s211 + $0x20] sm:$0xff]
        %v246 = vld [vmem:[%s211 + $0x28] sm:$0xff]
        %v247 = vld [vmem:[%s211 + $0x30] sm:$0xff]
        %v248 = vld [vmem:[%s211 + $0x38] sm:$0xff]
        %v249 = vld [vmem:[%s211 + $0x40] sm:$0xff]
        %v250 = vld [vmem:[%s211 + $0x48] sm:$0xff]
        %v251 = vld [vmem:[%s211 + $0x50] sm:$0xff]
        %v252 = vld [vmem:[%s211 + $0x58] sm:$0xff]
        %v253 = vld [vmem:[%s211 + $0x60] sm:$0xff]
        %v254 = vld [vmem:[%s211 + $0x68] sm:$0xff]
        %v255 = vld [vmem:[%s211 + $0x70] sm:$0xff]
        %v256 = vld [vmem:[%s211 + $0x78] sm:$0xff]
        %v257 = vld [vmem:[%s211 + $0x80] sm:$0xff]
        %v258 = vld [vmem:[%s211 + $0x88] sm:$0xff]
        %v259 = vld [vmem:[%s211 + $0x90] sm:$0xff]
        %v260 = vld [vmem:[%s211 + $0x98] sm:$0xff]
        %v261 = vld [vmem:[%s211 + $0xa0] sm:$0xff]
        %v262 = vld [vmem:[%s211 + $0xa8] sm:$0xff]
        %v263 = vld [vmem:[%s211 + $0xb0] sm:$0xff]
        %v264 = vld [vmem:[%s211 + $0xb8] sm:$0xff]
        %v265 = vld [vmem:[%s2] sm:$0xff]
        %267 = vset.pattern.permute.xlu0 0
        %268 = vperm.xlu0 %267, %v265
        %v269 = vpop.permute.xlu0 %268
        %v295 = vunpack.c.l.b16 %v241
        %v296 = vunpack.c.h.b16 %v241
        %v297 = vunpack.c.l.b16 %v242
        %v298 = vunpack.c.h.b16 %v242
        %v299 = vunpack.c.l.b16 %v243
        %v300 = vunpack.c.h.b16 %v243
        %v301 = vunpack.c.l.b16 %v244
        %v302 = vunpack.c.h.b16 %v244
        %v303 = vunpack.c.l.b16 %v245
        %v304 = vunpack.c.h.b16 %v245
        %v305 = vunpack.c.l.b16 %v246
        %v306 = vunpack.c.h.b16 %v246
        %v307 = vunpack.c.l.b16 %v247
        %v308 = vunpack.c.h.b16 %v247
        %v309 = vunpack.c.l.b16 %v248
        %v310 = vunpack.c.h.b16 %v248
        %v311 = vunpack.c.l.b16 %v249
        %v312 = vunpack.c.h.b16 %v249
        %v313 = vunpack.c.l.b16 %v250
        %v314 = vunpack.c.h.b16 %v250
        %v315 = vunpack.c.l.b16 %v251
        %v316 = vunpack.c.h.b16 %v251
        %v317 = vunpack.c.l.b16 %v252
        %v318 = vunpack.c.h.b16 %v252
        %v319 = vunpack.c.l.b16 %v253
        %v320 = vunpack.c.h.b16 %v253
        %v321 = vunpack.c.l.b16 %v254
        %v322 = vunpack.c.h.b16 %v254
        %v323 = vunpack.c.l.b16 %v255
        %v324 = vunpack.c.h.b16 %v255
        %v325 = vunpack.c.l.b16 %v256
        %v326 = vunpack.c.h.b16 %v256
        %v327 = vunpack.c.l.b16 %v257
        %v328 = vunpack.c.h.b16 %v257
        %v329 = vunpack.c.l.b16 %v258
        %v330 = vunpack.c.h.b16 %v258
        %v331 = vunpack.c.l.b16 %v259
        %v332 = vunpack.c.h.b16 %v259
        %v333 = vunpack.c.l.b16 %v260
        %v334 = vunpack.c.h.b16 %v260
        %v335 = vunpack.c.l.b16 %v261
        %v336 = vunpack.c.h.b16 %v261
        %v337 = vunpack.c.l.b16 %v262
        %v338 = vunpack.c.h.b16 %v262
        %v339 = vunpack.c.l.b16 %v263
        %v340 = vunpack.c.h.b16 %v263
        %v341 = vunpack.c.l.b16 %v264
        %v342 = vunpack.c.h.b16 %v264
        %v343 = vpack.c.b16 %v303, %v295
        %v344 = vpack.c.b16 %v304, %v296
        %v345 = vpack.c.b16 %v305, %v297
        %v346 = vpack.c.b16 %v306, %v298
        %v347 = vpack.c.b16 %v307, %v299
        %v348 = vpack.c.b16 %v308, %v300
        %v349 = vpack.c.b16 %v309, %v301
        %v350 = vpack.c.b16 %v310, %v302
        %v351 = vpack.c.b16 %v319, %v311
        %v352 = vpack.c.b16 %v320, %v312
        %v353 = vpack.c.b16 %v321, %v313
        %v354 = vpack.c.b16 %v322, %v314
        %v355 = vpack.c.b16 %v323, %v315
        %v356 = vpack.c.b16 %v324, %v316
        %v357 = vpack.c.b16 %v325, %v317
        %v358 = vpack.c.b16 %v326, %v318
        %v359 = vpack.c.b16 %v335, %v327
        %v360 = vpack.c.b16 %v336, %v328
        %v361 = vpack.c.b16 %v337, %v329
        %v362 = vpack.c.b16 %v338, %v330
        %v363 = vpack.c.b16 %v339, %v331
        %v364 = vpack.c.b16 %v340, %v332
        %v365 = vpack.c.b16 %v341, %v333
        %v366 = vpack.c.b16 %v342, %v334
        %vm391 = vcmask 392192
        %v393 = vsel %vm391, %v240, 0
        %395 = vmatpush.bf16.msra.mxu0 0
        %396 = vmatpush.bf16.msra.mxu0 0
        %397 = vmatpush.bf16.msra.mxu0 0
        %398 = vmatpush.bf16.msra.mxu0 0
        %399 = vmatpush.bf16.msra.mxu0 0
        %400 = vmatpush.bf16.msra.mxu0 %v359
        %401 = vmatpush.bf16.msra.mxu0 %v351
        %402 = vmatpush.bf16.msra.mxu0 %v343
        %403 = vmatmul.bf16.gmra.mxu0 %v393
        %v404 = vpop.f32.mrf.mxu0
        %v405 = vadd.f32 %v269, %v404
        %v406 = vpop.f32.mrf.mxu0
        %407 = vdwg.mxu0
        %408 = vmatpush.bf16.msra.mxu0 0
        %409 = vmatpush.bf16.msra.mxu0 0
        %410 = vmatpush.bf16.msra.mxu0 0
        %411 = vmatpush.bf16.msra.mxu0 0
        %412 = vmatpush.bf16.msra.mxu0 0
        %413 = vmatpush.bf16.msra.mxu0 %v360
        %414 = vmatpush.bf16.msra.mxu0 %v352
        %415 = vmatpush.bf16.msra.mxu0 %v344
        %416 = vmatmul.bf16.gmra.mxu0 %v393
        %v417 = vpop.f32.mrf.mxu0
        %v418 = vadd.f32 %v269, %v417
        %v419 = vpop.f32.mrf.mxu0
        %420 = vdwg.mxu0
        %421 = vmatpush.bf16.msra.mxu0 0
        %422 = vmatpush.bf16.msra.mxu0 0
        %423 = vmatpush.bf16.msra.mxu0 0
        %424 = vmatpush.bf16.msra.mxu0 0
        %425 = vmatpush.bf16.msra.mxu0 0
        %426 = vmatpush.bf16.msra.mxu0 %v361
        %427 = vmatpush.bf16.msra.mxu0 %v353
        %428 = vmatpush.bf16.msra.mxu0 %v345
        %429 = vmatmul.bf16.gmra.mxu0 %v393
        %v430 = vpop.f32.mrf.mxu0
        %v431 = vadd.f32 %v269, %v430
        %v432 = vpop.f32.mrf.mxu0
        %433 = vdwg.mxu0
        %434 = vmatpush.bf16.msra.mxu0 0
        %435 = vmatpush.bf16.msra.mxu0 0
        %436 = vmatpush.bf16.msra.mxu0 0
        %437 = vmatpush.bf16.msra.mxu0 0
        %438 = vmatpush.bf16.msra.mxu0 0
        %439 = vmatpush.bf16.msra.mxu0 %v362
        %440 = vmatpush.bf16.msra.mxu0 %v354
        %441 = vmatpush.bf16.msra.mxu0 %v346
        %442 = vmatmul.bf16.gmra.mxu0 %v393
        %v443 = vpop.f32.mrf.mxu0
        %v444 = vadd.f32 %v269, %v443
        %v445 = vpop.f32.mrf.mxu0
        %446 = vdwg.mxu0
        %447 = vmatpush.bf16.msra.mxu0 0
        %448 = vmatpush.bf16.msra.mxu0 0
        %449 = vmatpush.bf16.msra.mxu0 0
        %450 = vmatpush.bf16.msra.mxu0 0
        %451 = vmatpush.bf16.msra.mxu0 0
        %452 = vmatpush.bf16.msra.mxu0 %v363
        %453 = vmatpush.bf16.msra.mxu0 %v355
        %454 = vmatpush.bf16.msra.mxu0 %v347
        %455 = vmatmul.bf16.gmra.mxu0 %v393
        %v456 = vpop.f32.mrf.mxu0
        %v457 = vadd.f32 %v269, %v456
        %v458 = vpop.f32.mrf.mxu0
        %459 = vdwg.mxu0
        %460 = vmatpush.bf16.msra.mxu0 0
        %461 = vmatpush.bf16.msra.mxu0 0
        %462 = vmatpush.bf16.msra.mxu0 0
        %463 = vmatpush.bf16.msra.mxu0 0
        %464 = vmatpush.bf16.msra.mxu0 0
        %465 = vmatpush.bf16.msra.mxu0 %v364
        %466 = vmatpush.bf16.msra.mxu0 %v356
        %467 = vmatpush.bf16.msra.mxu0 %v348
        %468 = vmatmul.bf16.gmra.mxu0 %v393
        %v469 = vpop.f32.mrf.mxu0
        %v470 = vadd.f32 %v269, %v469
        %v471 = vpop.f32.mrf.mxu0
        %472 = vdwg.mxu0
        %473 = vmatpush.bf16.msra.mxu0 0
        %474 = vmatpush.bf16.msra.mxu0 0
        %475 = vmatpush.bf16.msra.mxu0 0
        %476 = vmatpush.bf16.msra.mxu0 0
        %477 = vmatpush.bf16.msra.mxu0 0
        %478 = vmatpush.bf16.msra.mxu0 %v365
        %479 = vmatpush.bf16.msra.mxu0 %v357
        %480 = vmatpush.bf16.msra.mxu0 %v349
        %481 = vmatmul.bf16.gmra.mxu0 %v393
        %v482 = vpop.f32.mrf.mxu0
        %v483 = vadd.f32 %v269, %v482
        %v484 = vpop.f32.mrf.mxu0
        %485 = vdwg.mxu0
        %486 = vmatpush.bf16.msra.mxu0 0
        %487 = vmatpush.bf16.msra.mxu0 0
        %488 = vmatpush.bf16.msra.mxu0 0
        %489 = vmatpush.bf16.msra.mxu0 0
        %490 = vmatpush.bf16.msra.mxu0 0
        %491 = vmatpush.bf16.msra.mxu0 %v366
        %492 = vmatpush.bf16.msra.mxu0 %v358
        %493 = vmatpush.bf16.msra.mxu0 %v350
        %494 = vmatmul.bf16.gmra.mxu0 %v393
        %v495 = vpop.f32.mrf.mxu0
        %v496 = vadd.f32 %v269, %v495
        %v497 = vpop.f32.mrf.mxu0
        %498 = vdwg.mxu0
        %vm499 = vcmp.gt.f32.partialorder %v405, 0.0
        %vm500 = vcmp.gt.f32.partialorder %v418, 0.0
        %vm501 = vcmp.gt.f32.partialorder %v431, 0.0
        %vm502 = vcmp.gt.f32.partialorder %v444, 0.0
        %vm503 = vcmp.gt.f32.partialorder %v457, 0.0
        %vm504 = vcmp.gt.f32.partialorder %v470, 0.0
        %vm505 = vcmp.gt.f32.partialorder %v483, 0.0
        %vm506 = vcmp.gt.f32.partialorder %v496, 0.0
        %v507 = vmul.f32 %v405, 0.2
        %v508 = vmul.f32 %v418, 0.2
        %v509 = vmul.f32 %v431, 0.2
        %v510 = vmul.f32 %v444, 0.2
        %v511 = vmul.f32 %v457, 0.2
        %v512 = vmul.f32 %v470, 0.2
        %v513 = vmul.f32 %v483, 0.2
        %v514 = vmul.f32 %v496, 0.2
        %v515 = vsel %vm499, %v405, %v507
        %v516 = vsel %vm500, %v418, %v508
        %v517 = vsel %vm501, %v431, %v509
        %v518 = vsel %vm502, %v444, %v510
        %v519 = vsel %vm503, %v457, %v511
        %v520 = vsel %vm504, %v470, %v512
        %v521 = vsel %vm505, %v483, %v513
        %v522 = vsel %vm506, %v496, %v514
        %523 = vst [vmem:[%s237] sm:$0xff] %v515
        %524 = vst [vmem:[%s237 + $0x8] sm:$0xff] %v516
        %525 = vst [vmem:[%s237 + $0x10] sm:$0xff] %v517
        %526 = vst [vmem:[%s237 + $0x18] sm:$0xff] %v518
        %527 = vst [vmem:[%s237 + $0x20] sm:$0xff] %v519
        %528 = vst [vmem:[%s237 + $0x28] sm:$0xff] %v520
        %529 = vst [vmem:[%s237 + $0x30] sm:$0xff] %v521
        %530 = vst [vmem:[%s237 + $0x38] sm:$0xff] %v522
        %s531 = smul.u32 8, %s14
        %p532 = scmp.lt.s32.totalorder %s531, 15
        %s533 = scalar_select %p532, %s531, 15
        %s534 = smul.addr %s533, 8
        %s535 = scalar_lea.vmem %s3, %s534
        // Predicated region
        $region56: #{discriminator_forward.3} parent=50 // pred_check
          %p536 = pneg %p100
        $region57: #{discriminator_forward.3} parent=50 // pred_check_branch
          %538 = sbr.rel (%p536) target = $region59
        $region58: #{discriminator_forward.3} parent=50 // pred_region
          %s539 = smul.u32 8, %s14
        $region59: #{discriminator_forward.3} parent=50 // pred_fallthru
          _
      $region51: #{discriminator_forward.3} parent=5 // pred_fallthru
        _
      %p540 = scmp.le.s32.totalorder 2, %s9
      // Predicated region
      $region60: #{discriminator_forward.3} parent=5 // pred_check
        %p541 = pneg %p540
      $region61: #{discriminator_forward.3} parent=5 // pred_check_branch
        %543 = sbr.rel (%p541) target = $region63
      $region62: #{discriminator_forward.3} parent=5 // pred_region
        %s544 = ssub.s32 %s9, 2
        // Predicated region
        $region64: #{discriminator_forward.3} parent=62 // pred_check
          %p545 = pneg %p106
        $region65: #{discriminator_forward.3} parent=62 // pred_check_branch
          %547 = sbr.rel (%p545) target = $region67
        $region66: #{discriminator_forward.3} parent=62 // pred_region
          %s548 = smul.u32 8, %s15
          %p549 = scmp.lt.s32.totalorder %s548, 15
          %s550 = scalar_select %p549, %s548, 15
          %s551 = smul.addr %s550, 8
          %s552 = scalar_lea.vmem %s3, %s551
        $region67: #{discriminator_forward.3} parent=62 // pred_fallthru
          _
      $region63: #{discriminator_forward.3} parent=5 // pred_fallthru
        _
    $region6: #{discriminator_forward.3} parent=1 // loop_footer
      %s13 = sadd.s32 1, %s9
    $region7: #{discriminator_forward.3} parent=1 // loop_footer_branch
      %8 = sbr.rel target = $region3
    $region8: #{discriminator_forward.3} parent=1 // loop_exit
      _

// kernel: discriminator_forward.4
$region0: #{discriminator_forward.4}
  #allocation0 [shape = 'u32[]', space=smem, size = 0x4, offset = 0x4, fixed_abs, tag = 'smem constant byte address 0x4 - core index']
  #allocation1 [shape = 'u32[72,128]{1,0:T(1,128)}', space=vmem, size = 0x9000, scoped, tag = 'internal scratch']
  %s0 = inlined_call_operand.vmem [shape: bf16[16,128], index: 0, kind: input, shape index: {}]
  %s1 = inlined_call_operand.vmem [shape: bf16[128,512], index: 1, kind: input, shape index: {}]
  %s2 = inlined_call_operand.vmem [shape: f32[16,1], index: 2, kind: input, shape index: {}]
  %s3 = inlined_call_operand.vmem [shape: f32[16,512], index: 3, kind: output, shape index: {}]
  %s4 = sld [smem:[#allocation0]]
  $region102: #{discriminator_forward.4} parent=0
    _
  %s6 = ssub.s32 1, %s4
  %s7 = scalar_select 0, %s6, %s4
  $region1: #{discriminator_forward.4} parent=0
    #allocation2 [shape = 'u8[131072]{0}', space=vmem, size = 0x20000, scoped, tag = 'input window, operand 1']
    #allocation3 [shape = 'u8[32768]{0}', space=vmem, size = 0x8000, scoped, tag = 'output window, operand 0']
    loop: start=0, step=1, limit=4
    $region2: #{discriminator_forward.4} parent=1 // loop_pre_header
      _
    $region3: #{discriminator_forward.4} parent=1 // loop_header
      %s9 = sphi 0, %s13
      %p10 = scmp.ge.s32.totalorder %s9, 4
      %s17 = sphi 0, %s17
      %s19 = sphi 0, %s17
      %s20 = sphi 0, %s19
      %s34 = sphi 0, %s20
      %s40 = sphi 0, %s42
      %s43 = sphi 0, %s40
      %s44 = sphi 0, %s43
      %s60 = sphi 0, %s44
      %s64 = sphi 0, %s64
      %s66 = sphi 0, %s64
      %s67 = sphi 0, %s66
      %s81 = sphi 0, %s67
      %s87 = sphi 0, %s89
      %s90 = sphi 0, %s87
      %s91 = sphi 0, %s90
      %s107 = sphi 0, %s91
    $region4: #{discriminator_forward.4} parent=1 // loop_header_branch
      %12 = sbr.rel (%p10) target = $region8
    $region5: #{discriminator_forward.4} parent=1 // loop_body
      %s14 = ssub.s32 %s9, 1
      %s15 = ssub.s32 %s9, 2
      %s16 = sadd.s32 %s9, 1
      %s18 = sadd.s32 %s17, 1
      %p21 = scmp.eq.s32.totalorder %s9, 1
      %p22 = scmp.ne.s32.totalorder %s17, %s19
      %p23 = scmp.eq.s32.totalorder %s9, 0
      %p24 = por %p22, %p23
      %p25 = scmp.ne.s32.totalorder %s17, %s19
      %p26 = scmp.eq.s32.totalorder %s14, 1
      %p27 = por %p25, %p26
      %p28 = scmp.ne.s32.totalorder %s19, %s20
      %p29 = scmp.eq.s32.totalorder %s14, 0
      %p30 = por %p28, %p29
      %p31 = scmp.ne.s32.totalorder %s19, %s20
      %p32 = scmp.eq.s32.totalorder %s15, 1
      %p33 = por %p31, %p32
      %p35 = scmp.ne.s32.totalorder %s20, %s34
      %p36 = scmp.eq.s32.totalorder %s15, 0
      %p37 = por %p35, %p36
      %s38 = ssub.s32 %s9, %s16
      %p39 = scmp.eq.s32.totalorder %s38, 0
      %s41 = sadd.s32 %s40, 1
      %s42 = scalar_select %p39, %s40, %s41
      %p45 = pneg %p39
      %p46 = scmp.eq.s32.totalorder %s9, 1
      %p47 = por %p45, %p46
      %p48 = scmp.ne.s32.totalorder %s40, %s43
      %p49 = scmp.eq.s32.totalorder %s9, 0
      %p50 = por %p48, %p49
      %p51 = scmp.ne.s32.totalorder %s40, %s43
      %p52 = scmp.eq.s32.totalorder %s14, 1
      %p53 = por %p51, %p52
      %p54 = scmp.ne.s32.totalorder %s43, %s44
      %p55 = scmp.eq.s32.totalorder %s14, 0
      %p56 = por %p54, %p55
      %p57 = scmp.ne.s32.totalorder %s43, %s44
      %p58 = scmp.eq.s32.totalorder %s15, 1
      %p59 = por %p57, %p58
      %p61 = scmp.ne.s32.totalorder %s44, %s60
      %p62 = scmp.eq.s32.totalorder %s15, 0
      %p63 = por %p61, %p62
      %s65 = sadd.s32 %s64, 1
      %p68 = scmp.eq.s32.totalorder %s9, 1
      %p69 = scmp.ne.s32.totalorder %s64, %s66
      %p70 = scmp.eq.s32.totalorder %s9, 0
      %p71 = por %p69, %p70
      %p72 = scmp.ne.s32.totalorder %s64, %s66
      %p73 = scmp.eq.s32.totalorder %s14, 1
      %p74 = por %p72, %p73
      %p75 = scmp.ne.s32.totalorder %s66, %s67
      %p76 = scmp.eq.s32.totalorder %s14, 0
      %p77 = por %p75, %p76
      %p78 = scmp.ne.s32.totalorder %s66, %s67
      %p79 = scmp.eq.s32.totalorder %s15, 1
      %p80 = por %p78, %p79
      %p82 = scmp.ne.s32.totalorder %s67, %s81
      %p83 = scmp.eq.s32.totalorder %s15, 0
      %p84 = por %p82, %p83
      %s85 = ssub.s32 %s9, %s16
      %p86 = scmp.eq.s32.totalorder %s85, 0
      %s88 = sadd.s32 %s87, 1
      %s89 = scalar_select %p86, %s87, %s88
      %p92 = pneg %p86
      %p93 = scmp.eq.s32.totalorder %s9, 1
      %p94 = por %p92, %p93
      %p95 = scmp.ne.s32.totalorder %s87, %s90
      %p96 = scmp.eq.s32.totalorder %s9, 0
      %p97 = por %p95, %p96
      %p98 = scmp.ne.s32.totalorder %s87, %s90
      %p99 = scmp.eq.s32.totalorder %s14, 1
      %p100 = por %p98, %p99
      %p101 = scmp.ne.s32.totalorder %s90, %s91
      %p102 = scmp.eq.s32.totalorder %s14, 0
      %p103 = por %p101, %p102
      %p104 = scmp.ne.s32.totalorder %s90, %s91
      %p105 = scmp.eq.s32.totalorder %s15, 1
      %p106 = por %p104, %p105
      %p108 = scmp.ne.s32.totalorder %s91, %s107
      %p109 = scmp.eq.s32.totalorder %s15, 0
      %p110 = por %p108, %p109
      %p111 = scmp.le.s32.totalorder 1, %s9
      %p112 = scmp.lt.s32.totalorder %s9, 3
      %p113 = pnand %p111, %p112
      %p114 = pneg %p113
      // Predicated region
      $region9: #{discriminator_forward.4} parent=5 // pred_check
        _
      $region10: #{discriminator_forward.4} parent=5 // pred_check_branch
        %116 = sbr.rel (%p113) target = $region12
      $region11: #{discriminator_forward.4} parent=5 // pred_region
        %s117 = ssub.s32 %s9, 1
        // Predicated region
        $region13: #{discriminator_forward.4} parent=11 // pred_check
          %p118 = pneg %p30
        $region14: #{discriminator_forward.4} parent=11 // pred_check_branch
          %120 = sbr.rel (%p118) target = $region16
        $region15: #{discriminator_forward.4} parent=11 // pred_region
          _
        $region16: #{discriminator_forward.4} parent=11 // pred_fallthru
          _
        // Predicated region
        $region17: #{discriminator_forward.4} parent=11 // pred_check
          %p121 = pneg %p77
        $region18: #{discriminator_forward.4} parent=11 // pred_check_branch
          %123 = sbr.rel (%p121) target = $region20
        $region19: #{discriminator_forward.4} parent=11 // pred_region
          _
        $region20: #{discriminator_forward.4} parent=11 // pred_fallthru
          _
      $region12: #{discriminator_forward.4} parent=5 // pred_fallthru
        _
      %p124 = scmp.lt.s32.totalorder %s9, 2
      // Predicated region
      $region21: #{discriminator_forward.4} parent=5 // pred_check
        %p125 = pneg %p124
      $region22: #{discriminator_forward.4} parent=5 // pred_check_branch
        %127 = sbr.rel (%p125) target = $region24
      $region23: #{discriminator_forward.4} parent=5 // pred_region
        // Predicated region
        $region25: #{discriminator_forward.4} parent=23 // pred_check
          %p128 = pneg %p50
        $region26: #{discriminator_forward.4} parent=23 // pred_check_branch
          %130 = sbr.rel (%p128) target = $region28
        $region27: #{discriminator_forward.4} parent=23 // pred_region
          %s131 = sand.u32 %s40, 1
          %s132 = sand.u32 %s40, 1
          %s133 = smul.addr %s132, 128
          %s134 = scalar_lea.vmem [#allocation2], %s133
          %s135 = smul.u32 2, %s9
          %s136 = smul.addr %s135, 4
          %s137 = scalar_lea.vmem %s1, %s136
          // Predicated region
          $region29: #{discriminator_forward.4} parent=27 // pred_check
            _
          $region30: #{discriminator_forward.4} parent=27 // pred_check_branch
            %139 = sbr.rel (0) target = $region32
          $region31: #{discriminator_forward.4} parent=27 // pred_region
            // Predicated region
            $region33: #{discriminator_forward.4} parent=31 // pred_check
              _
            $region34: #{discriminator_forward.4} parent=31 // pred_check_branch
              %141 = sbr.rel (0) target = $region36
            $region35: #{discriminator_forward.4} parent=31 // pred_region
              // Predicated region
              $region48: #{discriminator_forward.4} parent=35 // pred_check
                _
              $region49: #{discriminator_forward.4} parent=35 // pred_check_branch
                %187 = sbr.rel (0) target = $region51
              $region50: #{discriminator_forward.4} parent=35 // pred_region
                loop: start=0, step=1, limit=1
                $region52: #{discriminator_forward.4} parent=50 // loop_pre_header
                  _
                $region53: #{discriminator_forward.4} parent=50 // loop_header
                  %s189 = sphi 0, %s193
                  %p190 = scmp.ge.s32.totalorder %s189, 1
                  %s194 = sphi %s137, %s137
                  %s195 = sphi %s134, %s134
                $region54: #{discriminator_forward.4} parent=50 // loop_header_branch
                  %192 = sbr.rel (%p190) target = $region58
                $region55: #{discriminator_forward.4} parent=50 // loop_body
                  %v196 = vld [vmem:[%s194] sm:$0xff]
                  %197 = vst [vmem:[%s195] sm:$0xff] %v196
                  %v198 = vld [vmem:[%s194 + $0x10] sm:$0xff]
                  %199 = vst [vmem:[%s195 + $0x8] sm:$0xff] %v198
                  %v200 = vld [vmem:[%s194 + $0x20] sm:$0xff]
                  %201 = vst [vmem:[%s195 + $0x10] sm:$0xff] %v200
                  %v202 = vld [vmem:[%s194 + $0x30] sm:$0xff]
                  %203 = vst [vmem:[%s195 + $0x18] sm:$0xff] %v202
                  %v204 = vld [vmem:[%s194 + $0x40] sm:$0xff]
                  %205 = vst [vmem:[%s195 + $0x20] sm:$0xff] %v204
                  %v206 = vld [vmem:[%s194 + $0x50] sm:$0xff]
                  %207 = vst [vmem:[%s195 + $0x28] sm:$0xff] %v206
                  %v208 = vld [vmem:[%s194 + $0x60] sm:$0xff]
                  %209 = vst [vmem:[%s195 + $0x30] sm:$0xff] %v208
                  %v210 = vld [vmem:[%s194 + $0x70] sm:$0xff]
                  %211 = vst [vmem:[%s195 + $0x38] sm:$0xff] %v210
                  %v212 = vld [vmem:[%s194 + $0x80] sm:$0xff]
                  %213 = vst [vmem:[%s195 + $0x40] sm:$0xff] %v212
                  %v214 = vld [vmem:[%s194 + $0x90] sm:$0xff]
                  %215 = vst [vmem:[%s195 + $0x48] sm:$0xff] %v214
                  %v216 = vld [vmem:[%s194 + $0xa0] sm:$0xff]
                  %217 = vst [vmem:[%s195 + $0x50] sm:$0xff] %v216
                  %v218 = vld [vmem:[%s194 + $0xb0] sm:$0xff]
                  %219 = vst [vmem:[%s195 + $0x58] sm:$0xff] %v218
                  %v220 = vld [vmem:[%s194 + $0xc0] sm:$0xff]
                  %221 = vst [vmem:[%s195 + $0x60] sm:$0xff] %v220
                  %v222 = vld [vmem:[%s194 + $0xd0] sm:$0xff]
                  %223 = vst [vmem:[%s195 + $0x68] sm:$0xff] %v222
                  %v224 = vld [vmem:[%s194 + $0xe0] sm:$0xff]
                  %225 = vst [vmem:[%s195 + $0x70] sm:$0xff] %v224
                  %v226 = vld [vmem:[%s194 + $0xf0] sm:$0xff]
                  %227 = vst [vmem:[%s195 + $0x78] sm:$0xff] %v226
                $region56: #{discriminator_forward.4} parent=50 // loop_footer
                  %s193 = sadd.s32 1, %s189
                $region57: #{discriminator_forward.4} parent=50 // loop_footer_branch
                  %188 = sbr.rel target = $region53
                $region58: #{discriminator_forward.4} parent=50 // loop_exit
                  _
              $region51: #{discriminator_forward.4} parent=35 // pred_fallthru
                _
              // Predicated region
              $region59: #{discriminator_forward.4} parent=35 // pred_check
                _
              $region60: #{discriminator_forward.4} parent=35 // pred_check_branch
                %229 = sbr.rel target = $region62
              $region61: #{discriminator_forward.4} parent=35 // pred_region
                _
              $region62: #{discriminator_forward.4} parent=35 // pred_fallthru
                _
            $region36: #{discriminator_forward.4} parent=31 // pred_fallthru
              _
            // Predicated region
            $region37: #{discriminator_forward.4} parent=31 // pred_check
              _
            $region38: #{discriminator_forward.4} parent=31 // pred_check_branch
              %143 = sbr.rel target = $region40
            $region39: #{discriminator_forward.4} parent=31 // pred_region
              %s145 = ssub.s32 256, 1
              loop: start=0, step=1, limit=1
              $region41: #{discriminator_forward.4} parent=39 // loop_pre_header
                _
              $region42: #{discriminator_forward.4} parent=39 // loop_header
                %s147 = sphi 0, %s151
                %p148 = scmp.ge.s32.totalorder %s147, 1
                %s152 = sphi %s137, %s137
                %s153 = sphi %s134, %s134
              $region43: #{discriminator_forward.4} parent=39 // loop_header_branch
                %150 = sbr.rel (%p148) target = $region47
              $region44: #{discriminator_forward.4} parent=39 // loop_body
                %v154 = vld [vmem:[%s152] sm:%s145]
                %155 = vst [vmem:[%s153] sm:%s145] %v154
                %v156 = vld [vmem:[%s152 + $0x10] sm:%s145]
                %157 = vst [vmem:[%s153 + $0x8] sm:%s145] %v156
                %v158 = vld [vmem:[%s152 + $0x20] sm:%s145]
                %159 = vst [vmem:[%s153 + $0x10] sm:%s145] %v158
                %v160 = vld [vmem:[%s152 + $0x30] sm:%s145]
                %161 = vst [vmem:[%s153 + $0x18] sm:%s145] %v160
                %v162 = vld [vmem:[%s152 + $0x40] sm:%s145]
                %163 = vst [vmem:[%s153 + $0x20] sm:%s145] %v162
                %v164 = vld [vmem:[%s152 + $0x50] sm:%s145]
                %165 = vst [vmem:[%s153 + $0x28] sm:%s145] %v164
                %v166 = vld [vmem:[%s152 + $0x60] sm:%s145]
                %167 = vst [vmem:[%s153 + $0x30] sm:%s145] %v166
                %v168 = vld [vmem:[%s152 + $0x70] sm:%s145]
                %169 = vst [vmem:[%s153 + $0x38] sm:%s145] %v168
                %v170 = vld [vmem:[%s152 + $0x80] sm:%s145]
                %171 = vst [vmem:[%s153 + $0x40] sm:%s145] %v170
                %v172 = vld [vmem:[%s152 + $0x90] sm:%s145]
                %173 = vst [vmem:[%s153 + $0x48] sm:%s145] %v172
                %v174 = vld [vmem:[%s152 + $0xa0] sm:%s145]
                %175 = vst [vmem:[%s153 + $0x50] sm:%s145] %v174
                %v176 = vld [vmem:[%s152 + $0xb0] sm:%s145]
                %177 = vst [vmem:[%s153 + $0x58] sm:%s145] %v176
                %v178 = vld [vmem:[%s152 + $0xc0] sm:%s145]
                %179 = vst [vmem:[%s153 + $0x60] sm:%s145] %v178
                %v180 = vld [vmem:[%s152 + $0xd0] sm:%s145]
                %181 = vst [vmem:[%s153 + $0x68] sm:%s145] %v180
                %v182 = vld [vmem:[%s152 + $0xe0] sm:%s145]
                %183 = vst [vmem:[%s153 + $0x70] sm:%s145] %v182
                %v184 = vld [vmem:[%s152 + $0xf0] sm:%s145]
                %185 = vst [vmem:[%s153 + $0x78] sm:%s145] %v184
              $region45: #{discriminator_forward.4} parent=39 // loop_footer
                %s151 = sadd.s32 1, %s147
              $region46: #{discriminator_forward.4} parent=39 // loop_footer_branch
                %146 = sbr.rel target = $region42
              $region47: #{discriminator_forward.4} parent=39 // loop_exit
                _
            $region40: #{discriminator_forward.4} parent=31 // pred_fallthru
              _
          $region32: #{discriminator_forward.4} parent=27 // pred_fallthru
            _
          %230 = vnop
        $region28: #{discriminator_forward.4} parent=23 // pred_fallthru
          _
      $region24: #{discriminator_forward.4} parent=5 // pred_fallthru
        _
      %p231 = scmp.le.s32.totalorder 1, %s9
      %p232 = scmp.lt.s32.totalorder %s9, 3
      %p233 = pnand %p231, %p232
      %p234 = pneg %p233
      // Predicated region
      $region63: #{discriminator_forward.4} parent=5 // pred_check
        _
      $region64: #{discriminator_forward.4} parent=5 // pred_check_branch
        %236 = sbr.rel (%p233) target = $region66
      $region65: #{discriminator_forward.4} parent=5 // pred_region
        %s237 = ssub.s32 %s9, 1
        %s238 = sand.u32 %s43, 1
        %s239 = sand.u32 %s43, 1
        %s240 = smul.addr %s239, 128
        %s241 = scalar_lea.vmem [#allocation2], %s240
        // Predicated region
        $region67: #{discriminator_forward.4} parent=65 // pred_check
          %p242 = pneg %p56
        $region68: #{discriminator_forward.4} parent=65 // pred_check_branch
          %244 = sbr.rel (%p242) target = $region70
        $region69: #{discriminator_forward.4} parent=65 // pred_region
          _
        $region70: #{discriminator_forward.4} parent=65 // pred_fallthru
          _
        %p245 = pneg %p30
        %p246 = pneg %p27
        %s247 = sand.u32 %s43, 1
        %s248 = sand.u32 %s43, 1
        %s249 = smul.addr %s248, 128
        %s250 = scalar_lea.vmem [#allocation2], %s249
        %p251 = pneg %p56
        %p252 = pneg %p53
        %p253 = pneg %p77
        %p254 = pneg %p74
        %p255 = pneg %p103
        %p256 = pneg %p100
        %s257 = sand.u32 %s90, 1
        %s258 = sand.u32 %s90, 1
        %s259 = smul.addr %s258, 32
        %s260 = scalar_lea.vmem [#allocation3], %s259
        %s261 = smul.u32 2, %s14
        %s262 = smul.u32 2, %s14
        %v263 = vld [vmem:[%s0] sm:$0xf]
        %v264 = vld [vmem:[%s0 + $0x4] sm:$0xf]
        %v265 = vld [vmem:[%s241] sm:$0xff]
        %v266 = vld [vmem:[%s241 + $0x8] sm:$0xff]
        %v267 = vld [vmem:[%s241 + $0x10] sm:$0xff]
        %v268 = vld [vmem:[%s241 + $0x18] sm:$0xff]
        %v269 = vld [vmem:[%s241 + $0x20] sm:$0xff]
        %v270 = vld [vmem:[%s241 + $0x28] sm:$0xff]
        %v271 = vld [vmem:[%s241 + $0x30] sm:$0xff]
        %v272 = vld [vmem:[%s241 + $0x38] sm:$0xff]
        %v273 = vld [vmem:[%s241 + $0x40] sm:$0xff]
        %v274 = vld [vmem:[%s241 + $0x48] sm:$0xff]
        %v275 = vld [vmem:[%s241 + $0x50] sm:$0xff]
        %v276 = vld [vmem:[%s241 + $0x58] sm:$0xff]
        %v277 = vld [vmem:[%s241 + $0x60] sm:$0xff]
        %v278 = vld [vmem:[%s241 + $0x68] sm:$0xff]
        %v279 = vld [vmem:[%s241 + $0x70] sm:$0xff]
        %v280 = vld [vmem:[%s241 + $0x78] sm:$0xff]
        %v281 = vld [vmem:[%s2] sm:$0xff]
        %v282 = vld [vmem:[%s2 + $0x8] sm:$0xff]
        %284 = vset.pattern.permute.xlu0 0
        %285 = vperm.xlu0 %284, %v281
        %v286 = vpop.permute.xlu0 %285
        %289 = vset.pattern.permute.xlu0 0
        %290 = vperm.xlu0 %289, %v282
        %v291 = vpop.permute.xlu0 %290
        %v295 = vunpack.c.l.b16 %v263
        %v296 = vunpack.c.l.b16 %v264
        %v297 = vpack.c.b16 %v296, %v295
        %v315 = vunpack.c.l.b16 %v265
        %v316 = vunpack.c.h.b16 %v265
        %v317 = vunpack.c.l.b16 %v266
        %v318 = vunpack.c.h.b16 %v266
        %v319 = vunpack.c.l.b16 %v267
        %v320 = vunpack.c.h.b16 %v267
        %v321 = vunpack.c.l.b16 %v268
        %v322 = vunpack.c.h.b16 %v268
        %v323 = vunpack.c.l.b16 %v269
        %v324 = vunpack.c.h.b16 %v269
        %v325 = vunpack.c.l.b16 %v270
        %v326 = vunpack.c.h.b16 %v270
        %v327 = vunpack.c.l.b16 %v271
        %v328 = vunpack.c.h.b16 %v271
        %v329 = vunpack.c.l.b16 %v272
        %v330 = vunpack.c.h.b16 %v272
        %v331 = vunpack.c.l.b16 %v273
        %v332 = vunpack.c.h.b16 %v273
        %v333 = vunpack.c.l.b16 %v274
        %v334 = vunpack.c.h.b16 %v274
        %v335 = vunpack.c.l.b16 %v275
        %v336 = vunpack.c.h.b16 %v275
        %v337 = vunpack.c.l.b16 %v276
        %v338 = vunpack.c.h.b16 %v276
        %v339 = vunpack.c.l.b16 %v277
        %v340 = vunpack.c.h.b16 %v277
        %v341 = vunpack.c.l.b16 %v278
        %v342 = vunpack.c.h.b16 %v278
        %v343 = vunpack.c.l.b16 %v279
        %v344 = vunpack.c.h.b16 %v279
        %v345 = vunpack.c.l.b16 %v280
        %v346 = vunpack.c.h.b16 %v280
        %v347 = vpack.c.b16 %v317, %v315
        %v348 = vpack.c.b16 %v318, %v316
        %v349 = vpack.c.b16 %v321, %v319
        %v350 = vpack.c.b16 %v322, %v320
        %v351 = vpack.c.b16 %v325, %v323
        %v352 = vpack.c.b16 %v326, %v324
        %v353 = vpack.c.b16 %v329, %v327
        %v354 = vpack.c.b16 %v330, %v328
        %v355 = vpack.c.b16 %v333, %v331
        %v356 = vpack.c.b16 %v334, %v332
        %v357 = vpack.c.b16 %v337, %v335
        %v358 = vpack.c.b16 %v338, %v336
        %v359 = vpack.c.b16 %v341, %v339
        %v360 = vpack.c.b16 %v342, %v340
        %v361 = vpack.c.b16 %v345, %v343
        %v362 = vpack.c.b16 %v346, %v344
        %379 = vmatpush.bf16.msra.mxu0 %v361
        %380 = vmatpush.bf16.msra.mxu0 %v359
        %381 = vmatpush.bf16.msra.mxu0 %v357
        %382 = vmatpush.bf16.msra.mxu0 %v355
        %383 = vmatpush.bf16.msra.mxu0 %v353
        %384 = vmatpush.bf16.msra.mxu0 %v351
        %385 = vmatpush.bf16.msra.mxu0 %v349
        %386 = vmatpush.bf16.msra.mxu0 %v347
        %387 = vmatmul.bf16.gmra.mxu0 %v297
        %v388 = vpop.f32.mrf.mxu0
        %v389 = vadd.f32 %v286, %v388
        %v390 = vpop.f32.mrf.mxu0
        %v391 = vadd.f32 %v291, %v390
        %392 = vdwg.mxu0
        %393 = vmatpush.bf16.msra.mxu0 %v362
        %394 = vmatpush.bf16.msra.mxu0 %v360
        %395 = vmatpush.bf16.msra.mxu0 %v358
        %396 = vmatpush.bf16.msra.mxu0 %v356
        %397 = vmatpush.bf16.msra.mxu0 %v354
        %398 = vmatpush.bf16.msra.mxu0 %v352
        %399 = vmatpush.bf16.msra.mxu0 %v350
        %400 = vmatpush.bf16.msra.mxu0 %v348
        %401 = vmatmul.bf16.gmra.mxu0 %v297
        %v402 = vpop.f32.mrf.mxu0
        %v403 = vadd.f32 %v286, %v402
        %v404 = vpop.f32.mrf.mxu0
        %v405 = vadd.f32 %v291, %v404
        %406 = vdwg.mxu0
        %vm407 = vcmp.gt.f32.partialorder %v389, 0.0
        %vm408 = vcmp.gt.f32.partialorder %v403, 0.0
        %vm409 = vcmp.gt.f32.partialorder %v391, 0.0
        %vm410 = vcmp.gt.f32.partialorder %v405, 0.0
        %v411 = vmul.f32 %v389, 0.2
        %v412 = vmul.f32 %v403, 0.2
        %v413 = vmul.f32 %v391, 0.2
        %v414 = vmul.f32 %v405, 0.2
        %v415 = vsel %vm407, %v389, %v411
        %v416 = vsel %vm408, %v403, %v412
        %v417 = vsel %vm409, %v391, %v413
        %v418 = vsel %vm410, %v405, %v414
        %419 = vst [vmem:[%s260] sm:$0xff] %v415
        %420 = vst [vmem:[%s260 + $0x8] sm:$0xff] %v416
        %421 = vst [vmem:[%s260 + $0x10] sm:$0xff] %v417
        %422 = vst [vmem:[%s260 + $0x18] sm:$0xff] %v418
        %s423 = sand.u32 %s90, 1
        %s424 = sand.u32 %s90, 1
        %s425 = smul.addr %s424, 32
        %s426 = scalar_lea.vmem [#allocation3], %s425
        // Predicated region
        $region71: #{discriminator_forward.4} parent=65 // pred_check
          %p427 = pneg %p100
        $region72: #{discriminator_forward.4} parent=65 // pred_check_branch
          %429 = sbr.rel (%p427) target = $region74
        $region73: #{discriminator_forward.4} parent=65 // pred_region
          %s430 = smul.u32 2, %s14
          %s431 = smul.addr %s430, 8
          %s432 = scalar_lea.vmem %s3, %s431
          // Predicated region
          $region75: #{discriminator_forward.4} parent=73 // pred_check
            _
          $region76: #{discriminator_forward.4} parent=73 // pred_check_branch
            %434 = sbr.rel (0) target = $region78
          $region77: #{discriminator_forward.4} parent=73 // pred_region
            // Predicated region
            $region79: #{discriminator_forward.4} parent=77 // pred_check
              _
            $region80: #{discriminator_forward.4} parent=77 // pred_check_branch
              %436 = sbr.rel (0) target = $region82
            $region81: #{discriminator_forward.4} parent=77 // pred_region
              loop: start=0, step=1, limit=1
              $region83: #{discriminator_forward.4} parent=81 // loop_pre_header
                _
              $region84: #{discriminator_forward.4} parent=81 // loop_header
                %s438 = sphi 0, %s442
                %p439 = scmp.ge.s32.totalorder %s438, 1
                %s443 = sphi %s426, %s426
                %s444 = sphi %s432, %s432
              $region85: #{discriminator_forward.4} parent=81 // loop_header_branch
                %441 = sbr.rel (%p439) target = $region89
              $region86: #{discriminator_forward.4} parent=81 // loop_body
                %v445 = vld [vmem:[%s443] sm:$0xff]
                %446 = vst [vmem:[%s444] sm:$0xff] %v445
                %v447 = vld [vmem:[%s443 + $0x8] sm:$0xff]
                %448 = vst [vmem:[%s444 + $0x8] sm:$0xff] %v447
                %v449 = vld [vmem:[%s443 + $0x10] sm:$0xff]
                %450 = vst [vmem:[%s444 + $0x20] sm:$0xff] %v449
                %v451 = vld [vmem:[%s443 + $0x18] sm:$0xff]
                %452 = vst [vmem:[%s444 + $0x28] sm:$0xff] %v451
              $region87: #{discriminator_forward.4} parent=81 // loop_footer
                %s442 = sadd.s32 1, %s438
              $region88: #{discriminator_forward.4} parent=81 // loop_footer_branch
                %437 = sbr.rel target = $region84
              $region89: #{discriminator_forward.4} parent=81 // loop_exit
                _
            $region82: #{discriminator_forward.4} parent=77 // pred_fallthru
              _
            // Predicated region
            $region90: #{discriminator_forward.4} parent=77 // pred_check
              _
            $region91: #{discriminator_forward.4} parent=77 // pred_check_branch
              %454 = sbr.rel target = $region93
            $region92: #{discriminator_forward.4} parent=77 // pred_region
              _
            $region93: #{discriminator_forward.4} parent=77 // pred_fallthru
              _
          $region78: #{discriminator_forward.4} parent=73 // pred_fallthru
            _
          %455 = vnop
        $region74: #{discriminator_forward.4} parent=65 // pred_fallthru
          _
      $region66: #{discriminator_forward.4} parent=5 // pred_fallthru
        _
      %p456 = scmp.le.s32.totalorder 2, %s9
      // Predicated region
      $region94: #{discriminator_forward.4} parent=5 // pred_check
        %p457 = pneg %p456
      $region95: #{discriminator_forward.4} parent=5 // pred_check_branch
        %459 = sbr.rel (%p457) target = $region97
      $region96: #{discriminator_forward.4} parent=5 // pred_region
        %s460 = ssub.s32 %s9, 2
        // Predicated region
        $region98: #{discriminator_forward.4} parent=96 // pred_check
          %p461 = pneg %p106
        $region99: #{discriminator_forward.4} parent=96 // pred_check_branch
          %463 = sbr.rel (%p461) target = $region101
        $region100: #{discriminator_forward.4} parent=96 // pred_region
          %s464 = sand.u32 %s91, 1
          %s465 = sand.u32 %s91, 1
          %s466 = smul.addr %s465, 32
          %s467 = scalar_lea.vmem [#allocation3], %s466
        $region101: #{discriminator_forward.4} parent=96 // pred_fallthru
          _
      $region97: #{discriminator_forward.4} parent=5 // pred_fallthru
        _
    $region6: #{discriminator_forward.4} parent=1 // loop_footer
      %s13 = sadd.s32 1, %s9
    $region7: #{discriminator_forward.4} parent=1 // loop_footer_branch
      %8 = sbr.rel target = $region3
    $region8: #{discriminator_forward.4} parent=1 // loop_exit
      _

// kernel: discriminator_forward.5
$region0: #{discriminator_forward.5}
  #allocation0 [shape = 'u32[]', space=smem, size = 0x4, offset = 0x4, fixed_abs, tag = 'smem constant byte address 0x4 - core index']
  #allocation1 [shape = 'u32[72,128]{1,0:T(1,128)}', space=vmem, size = 0x9000, scoped, tag = 'internal scratch']
  %s0 = inlined_call_operand.vmem [shape: bf16[32,256], index: 0, kind: input, shape index: {}]
  %s1 = inlined_call_operand.vmem [shape: bf16[256,128], index: 1, kind: input, shape index: {}]
  %s2 = inlined_call_operand.vmem [shape: f32[32,1], index: 2, kind: input, shape index: {}]
  %s3 = inlined_call_operand.vmem [shape: f32[32,128], index: 3, kind: output, shape index: {}]
  %s4 = sld [smem:[#allocation0]]
  $region22: #{discriminator_forward.5} parent=0
    _
  %s6 = ssub.s32 1, %s4
  %s7 = scalar_select 0, %s6, %s4
  // Predicated region
  $region2: #{discriminator_forward.5} parent=0 // pred_check
    _
  $region3: #{discriminator_forward.5} parent=0 // pred_check_branch
    %9 = sbr.rel (0) target = $region5
  $region4: #{discriminator_forward.5} parent=0 // pred_region
    _
  $region5: #{discriminator_forward.5} parent=0 // pred_fallthru
    _
  // Predicated region
  $region6: #{discriminator_forward.5} parent=0 // pred_check
    _
  $region7: #{discriminator_forward.5} parent=0 // pred_check_branch
    %11 = sbr.rel (0) target = $region9
  $region8: #{discriminator_forward.5} parent=0 // pred_region
    _
  $region9: #{discriminator_forward.5} parent=0 // pred_fallthru
    _
  // Predicated region
  $region10: #{discriminator_forward.5} parent=0 // pred_check
    _
  $region11: #{discriminator_forward.5} parent=0 // pred_check_branch
    %13 = sbr.rel (0) target = $region13
  $region12: #{discriminator_forward.5} parent=0 // pred_region
    _
  $region13: #{discriminator_forward.5} parent=0 // pred_fallthru
    _
  %v14 = vld [vmem:[%s0] sm:$0xff]
  %v15 = vld [vmem:[%s0 + $0x8] sm:$0xff]
  %v16 = vld [vmem:[%s0 + $0x10] sm:$0xff]
  %v17 = vld [vmem:[%s0 + $0x18] sm:$0xff]
  %v18 = vld [vmem:[%s1] sm:$0xf]
  %v19 = vld [vmem:[%s1 + $0x4] sm:$0xf]
  %v20 = vld [vmem:[%s1 + $0x8] sm:$0xf]
  %v21 = vld [vmem:[%s1 + $0xc] sm:$0xf]
  %v22 = vld [vmem:[%s1 + $0x10] sm:$0xf]
  %v23 = vld [vmem:[%s1 + $0x14] sm:$0xf]
  %v24 = vld [vmem:[%s1 + $0x18] sm:$0xf]
  %v25 = vld [vmem:[%s1 + $0x1c] sm:$0xf]
  %v26 = vld [vmem:[%s1 + $0x20] sm:$0xf]
  %v27 = vld [vmem:[%s1 + $0x24] sm:$0xf]
  %v28 = vld [vmem:[%s1 + $0x28] sm:$0xf]
  %v29 = vld [vmem:[%s1 + $0x2c] sm:$0xf]
  %v30 = vld [vmem:[%s1 + $0x30] sm:$0xf]
  %v31 = vld [vmem:[%s1 + $0x34] sm:$0xf]
  %v32 = vld [vmem:[%s1 + $0x38] sm:$0xf]
  %v33 = vld [vmem:[%s1 + $0x3c] sm:$0xf]
  %v34 = vld [vmem:[%s1 + $0x40] sm:$0xf]
  %v35 = vld [vmem:[%s1 + $0x44] sm:$0xf]
  %v36 = vld [vmem:[%s1 + $0x48] sm:$0xf]
  %v37 = vld [vmem:[%s1 + $0x4c] sm:$0xf]
  %v38 = vld [vmem:[%s1 + $0x50] sm:$0xf]
  %v39 = vld [vmem:[%s1 + $0x54] sm:$0xf]
  %v40 = vld [vmem:[%s1 + $0x58] sm:$0xf]
  %v41 = vld [vmem:[%s1 + $0x5c] sm:$0xf]
  %v42 = vld [vmem:[%s1 + $0x60] sm:$0xf]
  %v43 = vld [vmem:[%s1 + $0x64] sm:$0xf]
  %v44 = vld [vmem:[%s1 + $0x68] sm:$0xf]
  %v45 = vld [vmem:[%s1 + $0x6c] sm:$0xf]
  %v46 = vld [vmem:[%s1 + $0x70] sm:$0xf]
  %v47 = vld [vmem:[%s1 + $0x74] sm:$0xf]
  %v48 = vld [vmem:[%s1 + $0x78] sm:$0xf]
  %v49 = vld [vmem:[%s1 + $0x7c] sm:$0xf]
  %v50 = vld [vmem:[%s2] sm:$0xff]
  %v51 = vld [vmem:[%s2 + $0x8] sm:$0xff]
  %v52 = vld [vmem:[%s2 + $0x10] sm:$0xff]
  %v53 = vld [vmem:[%s2 + $0x18] sm:$0xff]
  %55 = vset.pattern.permute.xlu0 0
  %56 = vperm.xlu0 %55, %v50
  %v57 = vpop.permute.xlu0 %56
  %60 = vset.pattern.permute.xlu0 0
  %61 = vperm.xlu0 %60, %v51
  %v62 = vpop.permute.xlu0 %61
  %65 = vset.pattern.permute.xlu0 0
  %66 = vperm.xlu0 %65, %v52
  %v67 = vpop.permute.xlu0 %66
  %70 = vset.pattern.permute.xlu0 0
  %71 = vperm.xlu0 %70, %v53
  %v72 = vpop.permute.xlu0 %71
  %v78 = vunpack.c.l.b16 %v14
  %v79 = vunpack.c.h.b16 %v14
  %v80 = vunpack.c.l.b16 %v15
  %v81 = vunpack.c.h.b16 %v15
  %v82 = vunpack.c.l.b16 %v16
  %v83 = vunpack.c.h.b16 %v16
  %v84 = vunpack.c.l.b16 %v17
  %v85 = vunpack.c.h.b16 %v17
  %v86 = vpack.c.b16 %v80, %v78
  %v87 = vpack.c.b16 %v81, %v79
  %v88 = vpack.c.b16 %v84, %v82
  %v89 = vpack.c.b16 %v85, %v83
  %v126 = vunpack.c.l.b16 %v18
  %v127 = vunpack.c.l.b16 %v19
  %v128 = vunpack.c.l.b16 %v20
  %v129 = vunpack.c.l.b16 %v21
  %v130 = vunpack.c.l.b16 %v22
  %v131 = vunpack.c.l.b16 %v23
  %v132 = vunpack.c.l.b16 %v24
  %v133 = vunpack.c.l.b16 %v25
  %v134 = vunpack.c.l.b16 %v26
  %v135 = vunpack.c.l.b16 %v27
  %v136 = vunpack.c.l.b16 %v28
  %v137 = vunpack.c.l.b16 %v29
  %v138 = vunpack.c.l.b16 %v30
  %v139 = vunpack.c.l.b16 %v31
  %v140 = vunpack.c.l.b16 %v32
  %v141 = vunpack.c.l.b16 %v33
  %v142 = vunpack.c.l.b16 %v34
  %v143 = vunpack.c.l.b16 %v35
  %v144 = vunpack.c.l.b16 %v36
  %v145 = vunpack.c.l.b16 %v37
  %v146 = vunpack.c.l.b16 %v38
  %v147 = vunpack.c.l.b16 %v39
  %v148 = vunpack.c.l.b16 %v40
  %v149 = vunpack.c.l.b16 %v41
  %v150 = vunpack.c.l.b16 %v42
  %v151 = vunpack.c.l.b16 %v43
  %v152 = vunpack.c.l.b16 %v44
  %v153 = vunpack.c.l.b16 %v45
  %v154 = vunpack.c.l.b16 %v46
  %v155 = vunpack.c.l.b16 %v47
  %v156 = vunpack.c.l.b16 %v48
  %v157 = vunpack.c.l.b16 %v49
  %v158 = vpack.c.b16 %v127, %v126
  %v159 = vpack.c.b16 %v129, %v128
  %v160 = vpack.c.b16 %v131, %v130
  %v161 = vpack.c.b16 %v133, %v132
  %v162 = vpack.c.b16 %v135, %v134
  %v163 = vpack.c.b16 %v137, %v136
  %v164 = vpack.c.b16 %v139, %v138
  %v165 = vpack.c.b16 %v141, %v140
  %v166 = vpack.c.b16 %v143, %v142
  %v167 = vpack.c.b16 %v145, %v144
  %v168 = vpack.c.b16 %v147, %v146
  %v169 = vpack.c.b16 %v149, %v148
  %v170 = vpack.c.b16 %v151, %v150
  %v171 = vpack.c.b16 %v153, %v152
  %v172 = vpack.c.b16 %v155, %v154
  %v173 = vpack.c.b16 %v157, %v156
  %190 = vmatpush.bf16.msra.mxu0 %v165
  %191 = vmatpush.bf16.msra.mxu0 %v164
  %192 = vmatpush.bf16.msra.mxu0 %v163
  %193 = vmatpush.bf16.msra.mxu0 %v162
  %194 = vmatpush.bf16.msra.mxu0 %v161
  %195 = vmatpush.bf16.msra.mxu0 %v160
  %196 = vmatpush.bf16.msra.mxu0 %v159
  %197 = vmatpush.bf16.msra.mxu0 %v158
  %198 = vmatmul.bf16.gmra.mxu0 %v86
  %v199 = vpop.f32.mrf.mxu0
  %v200 = vadd.f32 %v57, %v199
  %v201 = vpop.f32.mrf.mxu0
  %v202 = vadd.f32 %v62, %v201
  %203 = vmatmul.bf16.gmra.mxu0 %v88
  %v204 = vpop.f32.mrf.mxu0
  %v205 = vadd.f32 %v67, %v204
  %v206 = vpop.f32.mrf.mxu0
  %v207 = vadd.f32 %v72, %v206
  %208 = vdwg.mxu0
  %209 = vmatpush.bf16.msra.mxu0 %v173
  %210 = vmatpush.bf16.msra.mxu0 %v172
  %211 = vmatpush.bf16.msra.mxu0 %v171
  %212 = vmatpush.bf16.msra.mxu0 %v170
  %213 = vmatpush.bf16.msra.mxu0 %v169
  %214 = vmatpush.bf16.msra.mxu0 %v168
  %215 = vmatpush.bf16.msra.mxu0 %v167
  %216 = vmatpush.bf16.msra.mxu0 %v166
  %217 = vmatmul.bf16.gmra.mxu0 %v87
  %v218 = vpop.f32.mrf.mxu0
  %v219 = vadd.f32 %v200, %v218
  %v220 = vpop.f32.mrf.mxu0
  %v221 = vadd.f32 %v202, %v220
  %222 = vmatmul.bf16.gmra.mxu0 %v89
  %v223 = vpop.f32.mrf.mxu0
  %v224 = vadd.f32 %v205, %v223
  %v225 = vpop.f32.mrf.mxu0
  %v226 = vadd.f32 %v207, %v225
  %227 = vdwg.mxu0
  %vm228 = vcmp.gt.f32.partialorder %v219, 0.0
  %vm229 = vcmp.gt.f32.partialorder %v221, 0.0
  %vm230 = vcmp.gt.f32.partialorder %v224, 0.0
  %vm231 = vcmp.gt.f32.partialorder %v226, 0.0
  %v232 = vmul.f32 %v219, 0.2
  %v233 = vmul.f32 %v221, 0.2
  %v234 = vmul.f32 %v224, 0.2
  %v235 = vmul.f32 %v226, 0.2
  %v236 = vsel %vm228, %v219, %v232
  %v237 = vsel %vm229, %v221, %v233
  %v238 = vsel %vm230, %v224, %v234
  %v239 = vsel %vm231, %v226, %v235
  %240 = vst [vmem:[%s3] sm:$0xff] %v236
  %241 = vst [vmem:[%s3 + $0x8] sm:$0xff] %v237
  %242 = vst [vmem:[%s3 + $0x10] sm:$0xff] %v238
  %243 = vst [vmem:[%s3 + $0x18] sm:$0xff] %v239
  // Predicated region
  $region14: #{discriminator_forward.5} parent=0 // pred_check
    _
  $region15: #{discriminator_forward.5} parent=0 // pred_check_branch
    %245 = sbr.rel (0) target = $region17
  $region16: #{discriminator_forward.5} parent=0 // pred_region
    _
  $region17: #{discriminator_forward.5} parent=0 // pred_fallthru
    _
  // Predicated region
  $region18: #{discriminator_forward.5} parent=0 // pred_check
    _
  $region19: #{discriminator_forward.5} parent=0 // pred_check_branch
    %247 = sbr.rel (0) target = $region21
  $region20: #{discriminator_forward.5} parent=0 // pred_region
    _
  $region21: #{discriminator_forward.5} parent=0 // pred_fallthru
    _

</llo_original>
